<compile_context>
chip_gen: v7x
topology: tpu7x:2x2x1
jax: 0.10.0
libtpu: 0.0.40
codegen_flags: <defaults>
</compile_context>

<pallas_src>
import jax
import jax.numpy as jnp
from jax import lax
from jax.experimental import pallas as pl
from jax.experimental.pallas import tpu as pltpu

K = 3          # conv kernel size
EPS = 1e-5     # BatchNorm eps


# --------------------------------------------------------------------------
# In-kernel helpers
# --------------------------------------------------------------------------
def _edge_masks(L):
    """(1, L) boolean masks for the first / last position along the lane axis."""
    lane = lax.broadcasted_iota(jnp.int32, (1, L), 1)
    return lane == 0, lane == (L - 1)


def _conv3_taps(y, w_ref, first, last):
    """k=3 / pad=1 conv along the lane axis as three accumulated MXU dots.

    y:      (C_in, L) f32 activations (L on lanes).
    w_ref:  (3, C_out, C_in) bf16 ref (tap-major packed conv weight).
    first/last: (1, L) boundary masks (replace the wrap-around of roll with 0).
    Returns (C_out, L) f32.
    """
    L = y.shape[1]
    # roll(+1):  position l holds y[l-1]  (tap k=0);  l==0 masked to 0 (padding)
    # roll(L-1): position l holds y[l+1]  (tap k=2);  l==L-1 masked to 0
    left = jnp.where(first, 0.0, pltpu.roll(y, shift=1, axis=1))
    right = jnp.where(last, 0.0, pltpu.roll(y, shift=L - 1, axis=1))
    acc = jnp.dot(w_ref[0], left.astype(jnp.bfloat16),
                  preferred_element_type=jnp.float32)
    acc = acc + jnp.dot(w_ref[1], y.astype(jnp.bfloat16),
                        preferred_element_type=jnp.float32)
    acc = acc + jnp.dot(w_ref[2], right.astype(jnp.bfloat16),
                        preferred_element_type=jnp.float32)
    return acc


# --------------------------------------------------------------------------
# Pass A: conv1 + per-sample partial BN1 statistics
# --------------------------------------------------------------------------
def _conv_stats_kernel(x_ref, w_ref, acc_ref, s_ref, ss_ref):
    L = x_ref.shape[1]
    first, last = _edge_masks(L)
    acc = _conv3_taps(x_ref[...], w_ref, first, last)        # (C, L) f32
    acc_ref[...] = acc
    s_ref[...] = jnp.sum(acc, axis=1, keepdims=True)          # (C, 1)
    ss_ref[...] = jnp.sum(acc * acc, axis=1, keepdims=True)   # (C, 1)


# --------------------------------------------------------------------------
# Pass B: bn1 + relu + conv2 + per-sample partial BN2 statistics
# --------------------------------------------------------------------------
def _bn_relu_conv_stats_kernel(acc1_ref, scale_ref, shift_ref, w_ref,
                               acc_ref, s_ref, ss_ref):
    L = acc1_ref.shape[1]
    first, last = _edge_masks(L)
    y1 = jnp.maximum(acc1_ref[...] * scale_ref[...] + shift_ref[...], 0.0)
    acc = _conv3_taps(y1, w_ref, first, last)                 # (C, L) f32
    acc_ref[...] = acc
    s_ref[...] = jnp.sum(acc, axis=1, keepdims=True)
    ss_ref[...] = jnp.sum(acc * acc, axis=1, keepdims=True)


# --------------------------------------------------------------------------
# Pass C: bn2 + residual add + relu
# --------------------------------------------------------------------------
def _bn_residual_relu_kernel(acc2_ref, scale_ref, shift_ref, x_ref, out_ref):
    out_ref[...] = jnp.maximum(
        acc2_ref[...] * scale_ref[...] + shift_ref[...] + x_ref[...], 0.0)


# --------------------------------------------------------------------------
# pallas_call wrappers
# --------------------------------------------------------------------------
def _vmem_limit(block_bytes):
    # Double-buffered pipeline buffers + compiler-scratch headroom, derived
    # from the actual per-step block sizes (stays valid on v7x's 64 MiB VMEM).
    return int(min(max(2 * block_bytes + (4 << 20), 16 << 20), 64 << 20))


def _specs(C, L):
    act = pl.BlockSpec((None, C, L), lambda n: (n, 0, 0))      # per-sample slab
    stat = pl.BlockSpec((None, C, 1), lambda n: (n, 0, 0))     # per-sample partials
    vec = pl.BlockSpec((C, 1), lambda n: (0, 0))               # VMEM-resident
    wgt = pl.BlockSpec((K, C, C), lambda n: (0, 0, 0))         # VMEM-resident
    return act, stat, vec, wgt


def _pass_a(x, w_packed):
    N, C, L = x.shape
    act, stat, _, wgt = _specs(C, L)
    block_bytes = 2 * C * L * 4 + K * C * C * 2 + 2 * C * 4
    return pl.pallas_call(
        _conv_stats_kernel,
        grid=(N,),
        in_specs=[act, wgt],
        out_specs=[act, stat, stat],
        out_shape=[jax.ShapeDtypeStruct((N, C, L), jnp.float32),
                   jax.ShapeDtypeStruct((N, C, 1), jnp.float32),
                   jax.ShapeDtypeStruct((N, C, 1), jnp.float32)],
        compiler_params=pltpu.CompilerParams(
            dimension_semantics=("parallel",),
            vmem_limit_bytes=_vmem_limit(block_bytes)),
    )(x, w_packed)


def _pass_b(acc1, scale1, shift1, w_packed):
    N, C, L = acc1.shape
    act, stat, vec, wgt = _specs(C, L)
    block_bytes = 2 * C * L * 4 + K * C * C * 2 + 4 * C * 4
    return pl.pallas_call(
        _bn_relu_conv_stats_kernel,
        grid=(N,),
        in_specs=[act, vec, vec, wgt],
        out_specs=[act, stat, stat],
        out_shape=[jax.ShapeDtypeStruct((N, C, L), jnp.float32),
                   jax.ShapeDtypeStruct((N, C, 1), jnp.float32),
                   jax.ShapeDtypeStruct((N, C, 1), jnp.float32)],
        compiler_params=pltpu.CompilerParams(
            dimension_semantics=("parallel",),
            vmem_limit_bytes=_vmem_limit(block_bytes)),
    )(acc1, scale1, shift1, w_packed)


def _pass_c(acc2, scale2, shift2, x):
    N, C, L = x.shape
    act, _, vec, _ = _specs(C, L)
    block_bytes = 3 * C * L * 4 + 2 * C * 4
    return pl.pallas_call(
        _bn_residual_relu_kernel,
        grid=(N,),
        in_specs=[act, vec, vec, act],
        out_specs=act,
        out_shape=jax.ShapeDtypeStruct((N, C, L), jnp.float32),
        compiler_params=pltpu.CompilerParams(
            dimension_semantics=("parallel",),
            vmem_limit_bytes=_vmem_limit(block_bytes)),
    )(acc2, scale2, shift2, x)


def _bn_affine(s, ss, gamma, beta, count):
    """Reduce per-sample partial sums -> per-channel (scale, shift), f32.

    Note: single-pass E[x^2]-E[x]^2 variance in f32 (clamped at 0); this is a
    deliberate speed/precision tradeoff vs. a two-pass shifted formulation.
    """
    total = jnp.sum(s, axis=0)[:, 0]       # (C,)
    total2 = jnp.sum(ss, axis=0)[:, 0]     # (C,)
    mu = total / count
    var = jnp.maximum(total2 / count - mu * mu, 0.0)
    scale = gamma * lax.rsqrt(var + EPS)
    shift = beta - mu * scale
    return scale[:, None], shift[:, None]  # (C, 1) each


@jax.jit
def basic_block3x3_ncl(x_ncl, w1_oik, g1, b1, w2_oik, g2, b2):
    """PyTorch-layout forward. x: (N, C, L); w: (Cout, Cin, K); g/b: (C,)."""
    N, C, L = x_ncl.shape
    count = float(N * L)
    # (Cout, Cin, K) -> tap-major (K, Cout, Cin), bf16 for the native MXU path.
    w1p = jnp.transpose(w1_oik, (2, 0, 1)).astype(jnp.bfloat16)
    w2p = jnp.transpose(w2_oik, (2, 0, 1)).astype(jnp.bfloat16)

    acc1, s1, ss1 = _pass_a(x_ncl, w1p)
    scale1, shift1 = _bn_affine(s1, ss1, g1, b1, count)
    acc2, s2, ss2 = _pass_b(acc1, scale1, shift1, w2p)
    scale2, shift2 = _bn_affine(s2, ss2, g2, b2, count)
    return _pass_c(acc2, scale2, shift2, x_ncl)


# --------------------------------------------------------------------------
# Pure-JAX reference mirroring the PyTorch forward (training-mode BN)
# --------------------------------------------------------------------------
def reference_forward(x, w1, g1, b1, w2, g2, b2):
    def conv(y, w):
        return lax.conv_general_dilated(
            y, w, window_strides=(1,), padding=[(1, 1)],
            dimension_numbers=('NCH', 'OIH', 'NCH'),
            precision=lax.Precision.HIGHEST)

    def bn(y, g, b):
        mu = jnp.mean(y, axis=(0, 2), keepdims=True)
        var = jnp.mean((y - mu) ** 2, axis=(0, 2), keepdims=True)
        return (y - mu) * lax.rsqrt(var + EPS) * g[None, :, None] + b[None, :, None]

    out = jnp.maximum(bn(conv(x, w1), g1, b1), 0.0)
    out = bn(conv(out, w2), g2, b2)
    return jnp.maximum(x + out, 0.0)


if __name__ == "__main__":
    key = jax.random.PRNGKey(0)
    k1, k2, k3, k4, k5, k6, k7 = jax.random.split(key, 7)

    # inplanes3 == planes (required for the residual add when downsample=None)
    N, C, L = 2, 8, 32
    x = jax.random.normal(k1, (N, C, L), jnp.float32)                  # NCL like PyTorch
    w1 = jax.random.normal(k2, (C, C, K), jnp.float32) * 0.1           # conv1.weight
    w2 = jax.random.normal(k3, (C, C, K), jnp.float32) * 0.1           # conv2.weight
    g1 = 1.0 + 0.1 * jax.random.normal(k4, (C,), jnp.float32)          # bn1.weight
    b1 = 0.1 * jax.random.normal(k5, (C,), jnp.float32)                # bn1.bias
    g2 = 1.0 + 0.1 * jax.random.normal(k6, (C,), jnp.float32)          # bn2.weight
    b2 = 0.1 * jax.random.normal(k7, (C,), jnp.float32)                # bn2.bias

    out = jax.block_until_ready(basic_block3x3_ncl(x, w1, g1, b1, w2, g2, b2))

    ref = reference_forward(x, w1, g1, b1, w2, g2, b2)
    assert out.shape == (N, C, L), out.shape
    max_err = float(jnp.max(jnp.abs(out - ref)))
    # bf16 matmul operands (native MXU path) -> tolerance loosened accordingly.
    assert jnp.allclose(out, ref, atol=2e-2, rtol=2e-2), max_err

    print("KERNEL_OK")
</pallas_src>

<mosaic_0001>
module attributes {stable_mosaic.version = 11 : i64} {
  func.func @_conv_stats_kernel(%arg0: i32, %arg1: memref<1x8x32xf32, #tpu.memory_space<vmem>>, %arg2: memref<3x8x8xbf16, #tpu.memory_space<vmem>>, %arg3: memref<1x8x32xf32, #tpu.memory_space<vmem>>, %arg4: memref<1x8x1xf32, #tpu.memory_space<vmem>>, %arg5: memref<1x8x1xf32, #tpu.memory_space<vmem>>) attributes {dimension_semantics = [#tpu.dimension_semantics<parallel>], iteration_bounds = array<i64: 2>, scalar_prefetch = 0 : i64, scratch_operands = 0 : i64, tpu.core_type = #tpu.core_type<tc>, window_params = [{transform_indices = @transform_0, window_bounds = array<i64: 1, 8, 32>}, {pipeline_mode = #tpu.pipeline_mode<synchronous>, transform_indices = @transform_1, window_bounds = array<i64: 3, 8, 8>}, {transform_indices = @transform_2, window_bounds = array<i64: 1, 8, 32>}, {transform_indices = @transform_3, window_bounds = array<i64: 1, 8, 1>}, {transform_indices = @transform_4, window_bounds = array<i64: 1, 8, 1>}]} {
    %0 = tpu.iota {dimensions = array<i32: 1>} : vector<1x32xi32>
    %c0_i32 = arith.constant 0 : i32
    %1 = vector.broadcast %c0_i32 : i32 to vector<1x32xi32>
    %2 = arith.cmpi eq, %0, %1 : vector<1x32xi32>
    %c31_i32 = arith.constant 31 : i32
    %3 = vector.broadcast %c31_i32 : i32 to vector<1x32xi32>
    %4 = arith.cmpi eq, %0, %3 : vector<1x32xi32>
    %c0 = arith.constant 0 : index
    %c0_0 = arith.constant 0 : index
    %c0_1 = arith.constant 0 : index
    %5 = vector.load %arg1[%c0, %c0_0, %c0_1] : memref<1x8x32xf32, #tpu.memory_space<vmem>>, vector<1x8x32xf32>
    %6 = vector.shape_cast %5 : vector<1x8x32xf32> to vector<8x32xf32>
    %c1_i32 = arith.constant 1 : i32
    %7 = tpu.dynamic_rotate %6 by %c1_i32 dim 1 : vector<8x32xf32>, i32 -> vector<8x32xf32>
    %cst = arith.constant 0.000000e+00 : f32
    %8 = vector.shape_cast %2 : vector<1x32xi1> to vector<1x32xi1>
    %9 = vector.broadcast %8 : vector<1x32xi1> to vector<8x32xi1>
    %10 = vector.broadcast %cst : f32 to vector<8x32xf32>
    %11 = arith.select %9, %10, %7 : vector<8x32xi1>, vector<8x32xf32>
    %c31_i32_2 = arith.constant 31 : i32
    %12 = tpu.dynamic_rotate %6 by %c31_i32_2 dim 1 : vector<8x32xf32>, i32 -> vector<8x32xf32>
    %cst_3 = arith.constant 0.000000e+00 : f32
    %13 = vector.shape_cast %4 : vector<1x32xi1> to vector<1x32xi1>
    %14 = vector.broadcast %13 : vector<1x32xi1> to vector<8x32xi1>
    %15 = vector.broadcast %cst_3 : f32 to vector<8x32xf32>
    %16 = arith.select %14, %15, %12 : vector<8x32xi1>, vector<8x32xf32>
    %c0_4 = arith.constant 0 : index
    %c0_5 = arith.constant 0 : index
    %c0_6 = arith.constant 0 : index
    %17 = vector.load %arg2[%c0_4, %c0_5, %c0_6] : memref<3x8x8xbf16, #tpu.memory_space<vmem>>, vector<1x8x8xbf16>
    %18 = vector.shape_cast %17 : vector<1x8x8xbf16> to vector<8x8xbf16>
    %19 = arith.truncf %11 : vector<8x32xf32> to vector<8x32xbf16>
    %cst_7 = arith.constant dense<0.000000e+00> : vector<8x32xf32>
    %20 = tpu.matmul %18, %19, %cst_7 {dimension_numbers = #tpu.dot_dimension_numbers<[1], [0], [0], [1], [0, 0, 1, 1], [], []>} : vector<8x8xbf16>, vector<8x32xbf16>, vector<8x32xf32> -> vector<8x32xf32>
    %c1 = arith.constant 1 : index
    %c0_8 = arith.constant 0 : index
    %c0_9 = arith.constant 0 : index
    %21 = vector.load %arg2[%c1, %c0_8, %c0_9] : memref<3x8x8xbf16, #tpu.memory_space<vmem>>, vector<1x8x8xbf16>
    %22 = vector.shape_cast %21 : vector<1x8x8xbf16> to vector<8x8xbf16>
    %23 = arith.truncf %6 : vector<8x32xf32> to vector<8x32xbf16>
    %cst_10 = arith.constant dense<0.000000e+00> : vector<8x32xf32>
    %24 = tpu.matmul %22, %23, %cst_10 {dimension_numbers = #tpu.dot_dimension_numbers<[1], [0], [0], [1], [0, 0, 1, 1], [], []>} : vector<8x8xbf16>, vector<8x32xbf16>, vector<8x32xf32> -> vector<8x32xf32>
    %25 = arith.addf %20, %24 : vector<8x32xf32>
    %c2 = arith.constant 2 : index
    %c0_11 = arith.constant 0 : index
    %c0_12 = arith.constant 0 : index
    %26 = vector.load %arg2[%c2, %c0_11, %c0_12] : memref<3x8x8xbf16, #tpu.memory_space<vmem>>, vector<1x8x8xbf16>
    %27 = vector.shape_cast %26 : vector<1x8x8xbf16> to vector<8x8xbf16>
    %28 = arith.truncf %16 : vector<8x32xf32> to vector<8x32xbf16>
    %cst_13 = arith.constant dense<0.000000e+00> : vector<8x32xf32>
    %29 = tpu.matmul %27, %28, %cst_13 {dimension_numbers = #tpu.dot_dimension_numbers<[1], [0], [0], [1], [0, 0, 1, 1], [], []>} : vector<8x8xbf16>, vector<8x32xbf16>, vector<8x32xf32> -> vector<8x32xf32>
    %30 = arith.addf %25, %29 : vector<8x32xf32>
    %c0_14 = arith.constant 0 : index
    %c0_15 = arith.constant 0 : index
    %c0_16 = arith.constant 0 : index
    %31 = vector.load %arg3[%c0_14, %c0_15, %c0_16] : memref<1x8x32xf32, #tpu.memory_space<vmem>>, vector<1x8x32xf32>
    %32 = vector.shape_cast %31 : vector<1x8x32xf32> to vector<8x32xf32>
    %33 = vector.shape_cast %30 : vector<8x32xf32> to vector<1x8x32xf32>
    tpu.vector_store %arg3[%c0_14, %c0_15, %c0_16], %33 {strides = array<i32>} : memref<1x8x32xf32, #tpu.memory_space<vmem>>, vector<1x8x32xf32>,
    %cst_17 = arith.constant dense<0.000000e+00> : vector<8xf32>
    %34 = vector.multi_reduction <add>, %30, %cst_17 [1] : vector<8x32xf32> to vector<8xf32>
    %35 = vector.shape_cast %34 : vector<8xf32> to vector<8x1xf32>
    %c0_18 = arith.constant 0 : index
    %c0_19 = arith.constant 0 : index
    %c0_20 = arith.constant 0 : index
    %36 = vector.load %arg4[%c0_18, %c0_19, %c0_20] : memref<1x8x1xf32, #tpu.memory_space<vmem>>, vector<1x8x1xf32>
    %37 = vector.shape_cast %36 : vector<1x8x1xf32> to vector<8x1xf32>
    %38 = vector.shape_cast %35 : vector<8x1xf32> to vector<1x8x1xf32>
    tpu.vector_store %arg4[%c0_18, %c0_19, %c0_20], %38 {strides = array<i32>} : memref<1x8x1xf32, #tpu.memory_space<vmem>>, vector<1x8x1xf32>,
    %39 = arith.mulf %30, %30 : vector<8x32xf32>
    %cst_21 = arith.constant dense<0.000000e+00> : vector<8xf32>
    %40 = vector.multi_reduction <add>, %39, %cst_21 [1] : vector<8x32xf32> to vector<8xf32>
    %41 = vector.shape_cast %40 : vector<8xf32> to vector<8x1xf32>
    %c0_22 = arith.constant 0 : index
    %c0_23 = arith.constant 0 : index
    %c0_24 = arith.constant 0 : index
    %42 = vector.load %arg5[%c0_22, %c0_23, %c0_24] : memref<1x8x1xf32, #tpu.memory_space<vmem>>, vector<1x8x1xf32>
    %43 = vector.shape_cast %42 : vector<1x8x1xf32> to vector<8x1xf32>
    %44 = vector.shape_cast %41 : vector<8x1xf32> to vector<1x8x1xf32>
    tpu.vector_store %arg5[%c0_22, %c0_23, %c0_24], %44 {strides = array<i32>} : memref<1x8x1xf32, #tpu.memory_space<vmem>>, vector<1x8x1xf32>,
    return
  }
  func.func @transform_0(%arg0: i32) -> (i32, i32, i32) {
    %c0_i32 = arith.constant 0 : i32
    %c0_i32_0 = arith.constant 0 : i32
    %c0_i32_1 = arith.constant 0 : i32
    return %arg0, %c0_i32, %c0_i32_0 : i32, i32, i32
  }
  func.func @transform_1(%arg0: i32) -> (i32, i32, i32) {
    %c0_i32 = arith.constant 0 : i32
    %c0_i32_0 = arith.constant 0 : i32
    %c0_i32_1 = arith.constant 0 : i32
    %c0_i32_2 = arith.constant 0 : i32
    return %c0_i32, %c0_i32_0, %c0_i32_1 : i32, i32, i32
  }
  func.func @transform_2(%arg0: i32) -> (i32, i32, i32) {
    %c0_i32 = arith.constant 0 : i32
    %c0_i32_0 = arith.constant 0 : i32
    %c0_i32_1 = arith.constant 0 : i32
    return %arg0, %c0_i32, %c0_i32_0 : i32, i32, i32
  }
  func.func @transform_3(%arg0: i32) -> (i32, i32, i32) {
    %c0_i32 = arith.constant 0 : i32
    %c0_i32_0 = arith.constant 0 : i32
    %c0_i32_1 = arith.constant 0 : i32
    return %arg0, %c0_i32, %c0_i32_0 : i32, i32, i32
  }
  func.func @transform_4(%arg0: i32) -> (i32, i32, i32) {
    %c0_i32 = arith.constant 0 : i32
    %c0_i32_0 = arith.constant 0 : i32
    %c0_i32_1 = arith.constant 0 : i32
    return %arg0, %c0_i32, %c0_i32_0 : i32, i32, i32
  }
}

module attributes {stable_mosaic.version = 11 : i64} {
  func.func @_bn_residual_relu_kernel(%arg0: i32, %arg1: memref<1x8x32xf32, #tpu.memory_space<vmem>>, %arg2: memref<8x1xf32, #tpu.memory_space<vmem>>, %arg3: memref<8x1xf32, #tpu.memory_space<vmem>>, %arg4: memref<1x8x32xf32, #tpu.memory_space<vmem>>, %arg5: memref<1x8x32xf32, #tpu.memory_space<vmem>>) attributes {dimension_semantics = [#tpu.dimension_semantics<parallel>], iteration_bounds = array<i64: 2>, scalar_prefetch = 0 : i64, scratch_operands = 0 : i64, tpu.core_type = #tpu.core_type<tc>, window_params = [{transform_indices = @transform_0, window_bounds = array<i64: 1, 8, 32>}, {pipeline_mode = #tpu.pipeline_mode<synchronous>, transform_indices = @transform_1, window_bounds = array<i64: 8, 1>}, {pipeline_mode = #tpu.pipeline_mode<synchronous>, transform_indices = @transform_2, window_bounds = array<i64: 8, 1>}, {transform_indices = @transform_3, window_bounds = array<i64: 1, 8, 32>}, {transform_indices = @transform_4, window_bounds = array<i64: 1, 8, 32>}]} {
    %c0 = arith.constant 0 : index
    %c0_0 = arith.constant 0 : index
    %c0_1 = arith.constant 0 : index
    %0 = vector.load %arg1[%c0, %c0_0, %c0_1] : memref<1x8x32xf32, #tpu.memory_space<vmem>>, vector<1x8x32xf32>
    %1 = vector.shape_cast %0 : vector<1x8x32xf32> to vector<8x32xf32>
    %c0_2 = arith.constant 0 : index
    %c0_3 = arith.constant 0 : index
    %2 = vector.load %arg2[%c0_2, %c0_3] : memref<8x1xf32, #tpu.memory_space<vmem>>, vector<8x1xf32>
    %3 = vector.broadcast %2 : vector<8x1xf32> to vector<8x32xf32>
    %4 = arith.mulf %1, %3 : vector<8x32xf32>
    %c0_4 = arith.constant 0 : index
    %c0_5 = arith.constant 0 : index
    %5 = vector.load %arg3[%c0_4, %c0_5] : memref<8x1xf32, #tpu.memory_space<vmem>>, vector<8x1xf32>
    %6 = vector.broadcast %5 : vector<8x1xf32> to vector<8x32xf32>
    %7 = arith.addf %4, %6 : vector<8x32xf32>
    %c0_6 = arith.constant 0 : index
    %c0_7 = arith.constant 0 : index
    %c0_8 = arith.constant 0 : index
    %8 = vector.load %arg4[%c0_6, %c0_7, %c0_8] : memref<1x8x32xf32, #tpu.memory_space<vmem>>, vector<1x8x32xf32>
    %9 = vector.shape_cast %8 : vector<1x8x32xf32> to vector<8x32xf32>
    %10 = arith.addf %7, %9 : vector<8x32xf32>
    %cst = arith.constant 0.000000e+00 : f32
    %11 = vector.broadcast %cst : f32 to vector<8x32xf32>
    %12 = arith.maximumf %10, %11 : vector<8x32xf32>
    %c0_9 = arith.constant 0 : index
    %c0_10 = arith.constant 0 : index
    %c0_11 = arith.constant 0 : index
    %13 = vector.load %arg5[%c0_9, %c0_10, %c0_11] : memref<1x8x32xf32, #tpu.memory_space<vmem>>, vector<1x8x32xf32>
    %14 = vector.shape_cast %13 : vector<1x8x32xf32> to vector<8x32xf32>
    %15 = vector.shape_cast %12 : vector<8x32xf32> to vector<1x8x32xf32>
    tpu.vector_store %arg5[%c0_9, %c0_10, %c0_11], %15 {strides = array<i32>} : memref<1x8x32xf32, #tpu.memory_space<vmem>>, vector<1x8x32xf32>,
    return
  }
  func.func @transform_0(%arg0: i32) -> (i32, i32, i32) {
    %c0_i32 = arith.constant 0 : i32
    %c0_i32_0 = arith.constant 0 : i32
    %c0_i32_1 = arith.constant 0 : i32
    return %arg0, %c0_i32, %c0_i32_0 : i32, i32, i32
  }
  func.func @transform_1(%arg0: i32) -> (i32, i32) {
    %c0_i32 = arith.constant 0 : i32
    %c0_i32_0 = arith.constant 0 : i32
    %c0_i32_1 = arith.constant 0 : i32
    return %c0_i32, %c0_i32_0 : i32, i32
  }
  func.func @transform_2(%arg0: i32) -> (i32, i32) {
    %c0_i32 = arith.constant 0 : i32
    %c0_i32_0 = arith.constant 0 : i32
    %c0_i32_1 = arith.constant 0 : i32
    return %c0_i32, %c0_i32_0 : i32, i32
  }
  func.func @transform_3(%arg0: i32) -> (i32, i32, i32) {
    %c0_i32 = arith.constant 0 : i32
    %c0_i32_0 = arith.constant 0 : i32
    %c0_i32_1 = arith.constant 0 : i32
    return %arg0, %c0_i32, %c0_i32_0 : i32, i32, i32
  }
  func.func @transform_4(%arg0: i32) -> (i32, i32, i32) {
    %c0_i32 = arith.constant 0 : i32
    %c0_i32_0 = arith.constant 0 : i32
    %c0_i32_1 = arith.constant 0 : i32
    return %arg0, %c0_i32, %c0_i32_0 : i32, i32, i32
  }
}

module attributes {stable_mosaic.version = 11 : i64} {
  func.func @_bn_relu_conv_stats_kernel(%arg0: i32, %arg1: memref<1x8x32xf32, #tpu.memory_space<vmem>>, %arg2: memref<8x1xf32, #tpu.memory_space<vmem>>, %arg3: memref<8x1xf32, #tpu.memory_space<vmem>>, %arg4: memref<3x8x8xbf16, #tpu.memory_space<vmem>>, %arg5: memref<1x8x32xf32, #tpu.memory_space<vmem>>, %arg6: memref<1x8x1xf32, #tpu.memory_space<vmem>>, %arg7: memref<1x8x1xf32, #tpu.memory_space<vmem>>) attributes {dimension_semantics = [#tpu.dimension_semantics<parallel>], iteration_bounds = array<i64: 2>, scalar_prefetch = 0 : i64, scratch_operands = 0 : i64, tpu.core_type = #tpu.core_type<tc>, window_params = [{transform_indices = @transform_0, window_bounds = array<i64: 1, 8, 32>}, {pipeline_mode = #tpu.pipeline_mode<synchronous>, transform_indices = @transform_1, window_bounds = array<i64: 8, 1>}, {pipeline_mode = #tpu.pipeline_mode<synchronous>, transform_indices = @transform_2, window_bounds = array<i64: 8, 1>}, {pipeline_mode = #tpu.pipeline_mode<synchronous>, transform_indices = @transform_3, window_bounds = array<i64: 3, 8, 8>}, {transform_indices = @transform_4, window_bounds = array<i64: 1, 8, 32>}, {transform_indices = @transform_5, window_bounds = array<i64: 1, 8, 1>}, {transform_indices = @transform_6, window_bounds = array<i64: 1, 8, 1>}]} {
    %0 = tpu.iota {dimensions = array<i32: 1>} : vector<1x32xi32>
    %c0_i32 = arith.constant 0 : i32
    %1 = vector.broadcast %c0_i32 : i32 to vector<1x32xi32>
    %2 = arith.cmpi eq, %0, %1 : vector<1x32xi32>
    %c31_i32 = arith.constant 31 : i32
    %3 = vector.broadcast %c31_i32 : i32 to vector<1x32xi32>
    %4 = arith.cmpi eq, %0, %3 : vector<1x32xi32>
    %c0 = arith.constant 0 : index
    %c0_0 = arith.constant 0 : index
    %c0_1 = arith.constant 0 : index
    %5 = vector.load %arg1[%c0, %c0_0, %c0_1] : memref<1x8x32xf32, #tpu.memory_space<vmem>>, vector<1x8x32xf32>
    %6 = vector.shape_cast %5 : vector<1x8x32xf32> to vector<8x32xf32>
    %c0_2 = arith.constant 0 : index
    %c0_3 = arith.constant 0 : index
    %7 = vector.load %arg2[%c0_2, %c0_3] : memref<8x1xf32, #tpu.memory_space<vmem>>, vector<8x1xf32>
    %8 = vector.broadcast %7 : vector<8x1xf32> to vector<8x32xf32>
    %9 = arith.mulf %6, %8 : vector<8x32xf32>
    %c0_4 = arith.constant 0 : index
    %c0_5 = arith.constant 0 : index
    %10 = vector.load %arg3[%c0_4, %c0_5] : memref<8x1xf32, #tpu.memory_space<vmem>>, vector<8x1xf32>
    %11 = vector.broadcast %10 : vector<8x1xf32> to vector<8x32xf32>
    %12 = arith.addf %9, %11 : vector<8x32xf32>
    %cst = arith.constant 0.000000e+00 : f32
    %13 = vector.broadcast %cst : f32 to vector<8x32xf32>
    %14 = arith.maximumf %12, %13 : vector<8x32xf32>
    %c1_i32 = arith.constant 1 : i32
    %15 = tpu.dynamic_rotate %14 by %c1_i32 dim 1 : vector<8x32xf32>, i32 -> vector<8x32xf32>
    %cst_6 = arith.constant 0.000000e+00 : f32
    %16 = vector.shape_cast %2 : vector<1x32xi1> to vector<1x32xi1>
    %17 = vector.broadcast %16 : vector<1x32xi1> to vector<8x32xi1>
    %18 = vector.broadcast %cst_6 : f32 to vector<8x32xf32>
    %19 = arith.select %17, %18, %15 : vector<8x32xi1>, vector<8x32xf32>
    %c31_i32_7 = arith.constant 31 : i32
    %20 = tpu.dynamic_rotate %14 by %c31_i32_7 dim 1 : vector<8x32xf32>, i32 -> vector<8x32xf32>
    %cst_8 = arith.constant 0.000000e+00 : f32
    %21 = vector.shape_cast %4 : vector<1x32xi1> to vector<1x32xi1>
    %22 = vector.broadcast %21 : vector<1x32xi1> to vector<8x32xi1>
    %23 = vector.broadcast %cst_8 : f32 to vector<8x32xf32>
    %24 = arith.select %22, %23, %20 : vector<8x32xi1>, vector<8x32xf32>
    %c0_9 = arith.constant 0 : index
    %c0_10 = arith.constant 0 : index
    %c0_11 = arith.constant 0 : index
    %25 = vector.load %arg4[%c0_9, %c0_10, %c0_11] : memref<3x8x8xbf16, #tpu.memory_space<vmem>>, vector<1x8x8xbf16>
    %26 = vector.shape_cast %25 : vector<1x8x8xbf16> to vector<8x8xbf16>
    %27 = arith.truncf %19 : vector<8x32xf32> to vector<8x32xbf16>
    %cst_12 = arith.constant dense<0.000000e+00> : vector<8x32xf32>
    %28 = tpu.matmul %26, %27, %cst_12 {dimension_numbers = #tpu.dot_dimension_numbers<[1], [0], [0], [1], [0, 0, 1, 1], [], []>} : vector<8x8xbf16>, vector<8x32xbf16>, vector<8x32xf32> -> vector<8x32xf32>
    %c1 = arith.constant 1 : index
    %c0_13 = arith.constant 0 : index
    %c0_14 = arith.constant 0 : index
    %29 = vector.load %arg4[%c1, %c0_13, %c0_14] : memref<3x8x8xbf16, #tpu.memory_space<vmem>>, vector<1x8x8xbf16>
    %30 = vector.shape_cast %29 : vector<1x8x8xbf16> to vector<8x8xbf16>
    %31 = arith.truncf %14 : vector<8x32xf32> to vector<8x32xbf16>
    %cst_15 = arith.constant dense<0.000000e+00> : vector<8x32xf32>
    %32 = tpu.matmul %30, %31, %cst_15 {dimension_numbers = #tpu.dot_dimension_numbers<[1], [0], [0], [1], [0, 0, 1, 1], [], []>} : vector<8x8xbf16>, vector<8x32xbf16>, vector<8x32xf32> -> vector<8x32xf32>
    %33 = arith.addf %28, %32 : vector<8x32xf32>
    %c2 = arith.constant 2 : index
    %c0_16 = arith.constant 0 : index
    %c0_17 = arith.constant 0 : index
    %34 = vector.load %arg4[%c2, %c0_16, %c0_17] : memref<3x8x8xbf16, #tpu.memory_space<vmem>>, vector<1x8x8xbf16>
    %35 = vector.shape_cast %34 : vector<1x8x8xbf16> to vector<8x8xbf16>
    %36 = arith.truncf %24 : vector<8x32xf32> to vector<8x32xbf16>
    %cst_18 = arith.constant dense<0.000000e+00> : vector<8x32xf32>
    %37 = tpu.matmul %35, %36, %cst_18 {dimension_numbers = #tpu.dot_dimension_numbers<[1], [0], [0], [1], [0, 0, 1, 1], [], []>} : vector<8x8xbf16>, vector<8x32xbf16>, vector<8x32xf32> -> vector<8x32xf32>
    %38 = arith.addf %33, %37 : vector<8x32xf32>
    %c0_19 = arith.constant 0 : index
    %c0_20 = arith.constant 0 : index
    %c0_21 = arith.constant 0 : index
    %39 = vector.load %arg5[%c0_19, %c0_20, %c0_21] : memref<1x8x32xf32, #tpu.memory_space<vmem>>, vector<1x8x32xf32>
    %40 = vector.shape_cast %39 : vector<1x8x32xf32> to vector<8x32xf32>
    %41 = vector.shape_cast %38 : vector<8x32xf32> to vector<1x8x32xf32>
    tpu.vector_store %arg5[%c0_19, %c0_20, %c0_21], %41 {strides = array<i32>} : memref<1x8x32xf32, #tpu.memory_space<vmem>>, vector<1x8x32xf32>,
    %cst_22 = arith.constant dense<0.000000e+00> : vector<8xf32>
    %42 = vector.multi_reduction <add>, %38, %cst_22 [1] : vector<8x32xf32> to vector<8xf32>
    %43 = vector.shape_cast %42 : vector<8xf32> to vector<8x1xf32>
    %c0_23 = arith.constant 0 : index
    %c0_24 = arith.constant 0 : index
    %c0_25 = arith.constant 0 : index
    %44 = vector.load %arg6[%c0_23, %c0_24, %c0_25] : memref<1x8x1xf32, #tpu.memory_space<vmem>>, vector<1x8x1xf32>
    %45 = vector.shape_cast %44 : vector<1x8x1xf32> to vector<8x1xf32>
    %46 = vector.shape_cast %43 : vector<8x1xf32> to vector<1x8x1xf32>
    tpu.vector_store %arg6[%c0_23, %c0_24, %c0_25], %46 {strides = array<i32>} : memref<1x8x1xf32, #tpu.memory_space<vmem>>, vector<1x8x1xf32>,
    %47 = arith.mulf %38, %38 : vector<8x32xf32>
    %cst_26 = arith.constant dense<0.000000e+00> : vector<8xf32>
    %48 = vector.multi_reduction <add>, %47, %cst_26 [1] : vector<8x32xf32> to vector<8xf32>
    %49 = vector.shape_cast %48 : vector<8xf32> to vector<8x1xf32>
    %c0_27 = arith.constant 0 : index
    %c0_28 = arith.constant 0 : index
    %c0_29 = arith.constant 0 : index
    %50 = vector.load %arg7[%c0_27, %c0_28, %c0_29] : memref<1x8x1xf32, #tpu.memory_space<vmem>>, vector<1x8x1xf32>
    %51 = vector.shape_cast %50 : vector<1x8x1xf32> to vector<8x1xf32>
    %52 = vector.shape_cast %49 : vector<8x1xf32> to vector<1x8x1xf32>
    tpu.vector_store %arg7[%c0_27, %c0_28, %c0_29], %52 {strides = array<i32>} : memref<1x8x1xf32, #tpu.memory_space<vmem>>, vector<1x8x1xf32>,
    return
  }
  func.func @transform_0(%arg0: i32) -> (i32, i32, i32) {
    %c0_i32 = arith.constant 0 : i32
    %c0_i32_0 = arith.constant 0 : i32
    %c0_i32_1 = arith.constant 0 : i32
    return %arg0, %c0_i32, %c0_i32_0 : i32, i32, i32
  }
  func.func @transform_1(%arg0: i32) -> (i32, i32) {
    %c0_i32 = arith.constant 0 : i32
    %c0_i32_0 = arith.constant 0 : i32
    %c0_i32_1 = arith.constant 0 : i32
    return %c0_i32, %c0_i32_0 : i32, i32
  }
  func.func @transform_2(%arg0: i32) -> (i32, i32) {
    %c0_i32 = arith.constant 0 : i32
    %c0_i32_0 = arith.constant 0 : i32
    %c0_i32_1 = arith.constant 0 : i32
    return %c0_i32, %c0_i32_0 : i32, i32
  }
  func.func @transform_3(%arg0: i32) -> (i32, i32, i32) {
    %c0_i32 = arith.constant 0 : i32
    %c0_i32_0 = arith.constant 0 : i32
    %c0_i32_1 = arith.constant 0 : i32
    %c0_i32_2 = arith.constant 0 : i32
    return %c0_i32, %c0_i32_0, %c0_i32_1 : i32, i32, i32
  }
  func.func @transform_4(%arg0: i32) -> (i32, i32, i32) {
    %c0_i32 = arith.constant 0 : i32
    %c0_i32_0 = arith.constant 0 : i32
    %c0_i32_1 = arith.constant 0 : i32
    return %arg0, %c0_i32, %c0_i32_0 : i32, i32, i32
  }
  func.func @transform_5(%arg0: i32) -> (i32, i32, i32) {
    %c0_i32 = arith.constant 0 : i32
    %c0_i32_0 = arith.constant 0 : i32
    %c0_i32_1 = arith.constant 0 : i32
    return %arg0, %c0_i32, %c0_i32_0 : i32, i32, i32
  }
  func.func @transform_6(%arg0: i32) -> (i32, i32, i32) {
    %c0_i32 = arith.constant 0 : i32
    %c0_i32_0 = arith.constant 0 : i32
    %c0_i32_1 = arith.constant 0 : i32
    return %arg0, %c0_i32, %c0_i32_0 : i32, i32, i32
  }
}

</mosaic_0001>

<llo_original>
// kernel: basic_block3x3_ncl.5
$region0: #{basic_block3x3_ncl.5}
  #allocation0 [shape = 'u32[]', space=smem, size = 0x4, offset = 0x4, fixed_abs, tag = 'smem constant byte address 0x4 - core index']
  #allocation1 [shape = 'u32[144,128]{1,0:T(1,128)}', space=vmem, size = 0x12000, scoped, tag = 'internal scratch']
  %s0 = inlined_call_operand.vmem [shape: f32[2,8,32], index: 0, kind: input, shape index: {}]
  %s1 = inlined_call_operand.vmem [shape: f32[8,1], index: 1, kind: input, shape index: {}]
  %s2 = inlined_call_operand.vmem [shape: f32[8,1], index: 2, kind: input, shape index: {}]
  %s3 = inlined_call_operand.vmem [shape: f32[2,8,32], index: 3, kind: input, shape index: {}]
  %s4 = inlined_call_operand.hbm [shape: f32[2,8,32], index: 4, kind: output, shape index: {}]
  %s5 = sld [smem:[#allocation0]]
  $region49: #{basic_block3x3_ncl.5} parent=0
    _
  %s7 = ssub.s32 1, %s5
  %s8 = scalar_select 0, %s7, %s5
  $region1: #{basic_block3x3_ncl.5} parent=0
    #allocation2 [shape = 'u8[8192]{0}', space=vmem, size = 0x2000, scoped, tag = 'output window, operand 0']
    #allocation3 [shape = 's32[2]{0}', space=sflag, size = 0x8, scoped, tag = 'scoped memory for basic_block3x3_ncl.5']
    %9 = vsyncpa [#allocation3], 0
    %s10 = scalar_lea.sflag [#allocation3], 1
    %11 = vsyncpa %s10, 0
    loop: start=0, step=1, limit=4
    $region2: #{basic_block3x3_ncl.5} parent=1 // loop_pre_header
      _
    $region3: #{basic_block3x3_ncl.5} parent=1 // loop_header
      %s13 = sphi 0, %s17
      %p14 = scmp.ge.s32.totalorder %s13, 4
      %s23 = sphi 0, %s25
      %s26 = sphi 0, %s23
      %s27 = sphi 0, %s26
      %s43 = sphi 0, %s27
      %s47 = sphi 0, %s47
      %s49 = sphi 0, %s47
      %s50 = sphi 0, %s49
      %s64 = sphi 0, %s50
      %s68 = sphi 0, %s68
      %s70 = sphi 0, %s68
      %s71 = sphi 0, %s70
      %s85 = sphi 0, %s71
      %s91 = sphi 0, %s93
      %s94 = sphi 0, %s91
      %s95 = sphi 0, %s94
      %s111 = sphi 0, %s95
      %s117 = sphi 0, %s119
      %s120 = sphi 0, %s117
      %s121 = sphi 0, %s120
      %s137 = sphi 0, %s121
    $region4: #{basic_block3x3_ncl.5} parent=1 // loop_header_branch
      %16 = sbr.rel (%p14) target = $region8
    $region5: #{basic_block3x3_ncl.5} parent=1 // loop_body
      %s18 = ssub.s32 %s13, 1
      %s19 = ssub.s32 %s13, 2
      %s20 = sadd.s32 %s13, 1
      %s21 = ssub.s32 %s13, %s20
      %p22 = scmp.eq.s32.totalorder %s21, 0
      %s24 = sadd.s32 %s23, 1
      %s25 = scalar_select %p22, %s23, %s24
      %p28 = pneg %p22
      %p29 = scmp.eq.s32.totalorder %s13, 1
      %p30 = por %p28, %p29
      %p31 = scmp.ne.s32.totalorder %s23, %s26
      %p32 = scmp.eq.s32.totalorder %s13, 0
      %p33 = por %p31, %p32
      %p34 = scmp.ne.s32.totalorder %s23, %s26
      %p35 = scmp.eq.s32.totalorder %s18, 1
      %p36 = por %p34, %p35
      %p37 = scmp.ne.s32.totalorder %s26, %s27
      %p38 = scmp.eq.s32.totalorder %s18, 0
      %p39 = por %p37, %p38
      %p40 = scmp.ne.s32.totalorder %s26, %s27
      %p41 = scmp.eq.s32.totalorder %s19, 1
      %p42 = por %p40, %p41
      %p44 = scmp.ne.s32.totalorder %s27, %s43
      %p45 = scmp.eq.s32.totalorder %s19, 0
      %p46 = por %p44, %p45
      %s48 = sadd.s32 %s47, 1
      %p51 = scmp.eq.s32.totalorder %s13, 1
      %p52 = scmp.ne.s32.totalorder %s47, %s49
      %p53 = scmp.eq.s32.totalorder %s13, 0
      %p54 = por %p52, %p53
      %p55 = scmp.ne.s32.totalorder %s47, %s49
      %p56 = scmp.eq.s32.totalorder %s18, 1
      %p57 = por %p55, %p56
      %p58 = scmp.ne.s32.totalorder %s49, %s50
      %p59 = scmp.eq.s32.totalorder %s18, 0
      %p60 = por %p58, %p59
      %p61 = scmp.ne.s32.totalorder %s49, %s50
      %p62 = scmp.eq.s32.totalorder %s19, 1
      %p63 = por %p61, %p62
      %p65 = scmp.ne.s32.totalorder %s50, %s64
      %p66 = scmp.eq.s32.totalorder %s19, 0
      %p67 = por %p65, %p66
      %s69 = sadd.s32 %s68, 1
      %p72 = scmp.eq.s32.totalorder %s13, 1
      %p73 = scmp.ne.s32.totalorder %s68, %s70
      %p74 = scmp.eq.s32.totalorder %s13, 0
      %p75 = por %p73, %p74
      %p76 = scmp.ne.s32.totalorder %s68, %s70
      %p77 = scmp.eq.s32.totalorder %s18, 1
      %p78 = por %p76, %p77
      %p79 = scmp.ne.s32.totalorder %s70, %s71
      %p80 = scmp.eq.s32.totalorder %s18, 0
      %p81 = por %p79, %p80
      %p82 = scmp.ne.s32.totalorder %s70, %s71
      %p83 = scmp.eq.s32.totalorder %s19, 1
      %p84 = por %p82, %p83
      %p86 = scmp.ne.s32.totalorder %s71, %s85
      %p87 = scmp.eq.s32.totalorder %s19, 0
      %p88 = por %p86, %p87
      %s89 = ssub.s32 %s13, %s20
      %p90 = scmp.eq.s32.totalorder %s89, 0
      %s92 = sadd.s32 %s91, 1
      %s93 = scalar_select %p90, %s91, %s92
      %p96 = pneg %p90
      %p97 = scmp.eq.s32.totalorder %s13, 1
      %p98 = por %p96, %p97
      %p99 = scmp.ne.s32.totalorder %s91, %s94
      %p100 = scmp.eq.s32.totalorder %s13, 0
      %p101 = por %p99, %p100
      %p102 = scmp.ne.s32.totalorder %s91, %s94
      %p103 = scmp.eq.s32.totalorder %s18, 1
      %p104 = por %p102, %p103
      %p105 = scmp.ne.s32.totalorder %s94, %s95
      %p106 = scmp.eq.s32.totalorder %s18, 0
      %p107 = por %p105, %p106
      %p108 = scmp.ne.s32.totalorder %s94, %s95
      %p109 = scmp.eq.s32.totalorder %s19, 1
      %p110 = por %p108, %p109
      %p112 = scmp.ne.s32.totalorder %s95, %s111
      %p113 = scmp.eq.s32.totalorder %s19, 0
      %p114 = por %p112, %p113
      %s115 = ssub.s32 %s13, %s20
      %p116 = scmp.eq.s32.totalorder %s115, 0
      %s118 = sadd.s32 %s117, 1
      %s119 = scalar_select %p116, %s117, %s118
      %p122 = pneg %p116
      %p123 = scmp.eq.s32.totalorder %s13, 1
      %p124 = por %p122, %p123
      %p125 = scmp.ne.s32.totalorder %s117, %s120
      %p126 = scmp.eq.s32.totalorder %s13, 0
      %p127 = por %p125, %p126
      %p128 = scmp.ne.s32.totalorder %s117, %s120
      %p129 = scmp.eq.s32.totalorder %s18, 1
      %p130 = por %p128, %p129
      %p131 = scmp.ne.s32.totalorder %s120, %s121
      %p132 = scmp.eq.s32.totalorder %s18, 0
      %p133 = por %p131, %p132
      %p134 = scmp.ne.s32.totalorder %s120, %s121
      %p135 = scmp.eq.s32.totalorder %s19, 1
      %p136 = por %p134, %p135
      %p138 = scmp.ne.s32.totalorder %s121, %s137
      %p139 = scmp.eq.s32.totalorder %s19, 0
      %p140 = por %p138, %p139
      %p141 = scmp.le.s32.totalorder 1, %s13
      %p142 = scmp.lt.s32.totalorder %s13, 3
      %p143 = pnand %p141, %p142
      %p144 = pneg %p143
      // Predicated region
      $region9: #{basic_block3x3_ncl.5} parent=5 // pred_check
        _
      $region10: #{basic_block3x3_ncl.5} parent=5 // pred_check_branch
        %146 = sbr.rel (%p143) target = $region12
      $region11: #{basic_block3x3_ncl.5} parent=5 // pred_region
        %s147 = ssub.s32 %s13, 1
        // Predicated region
        $region13: #{basic_block3x3_ncl.5} parent=11 // pred_check
          %p148 = pneg %p60
        $region14: #{basic_block3x3_ncl.5} parent=11 // pred_check_branch
          %150 = sbr.rel (%p148) target = $region16
        $region15: #{basic_block3x3_ncl.5} parent=11 // pred_region
          _
        $region16: #{basic_block3x3_ncl.5} parent=11 // pred_fallthru
          _
        // Predicated region
        $region17: #{basic_block3x3_ncl.5} parent=11 // pred_check
          %p151 = pneg %p81
        $region18: #{basic_block3x3_ncl.5} parent=11 // pred_check_branch
          %153 = sbr.rel (%p151) target = $region20
        $region19: #{basic_block3x3_ncl.5} parent=11 // pred_region
          _
        $region20: #{basic_block3x3_ncl.5} parent=11 // pred_fallthru
          _
      $region12: #{basic_block3x3_ncl.5} parent=5 // pred_fallthru
        _
      %p154 = scmp.lt.s32.totalorder %s13, 2
      // Predicated region
      $region21: #{basic_block3x3_ncl.5} parent=5 // pred_check
        %p155 = pneg %p154
      $region22: #{basic_block3x3_ncl.5} parent=5 // pred_check_branch
        %157 = sbr.rel (%p155) target = $region24
      $region23: #{basic_block3x3_ncl.5} parent=5 // pred_region
        // Predicated region
        $region25: #{basic_block3x3_ncl.5} parent=23 // pred_check
          %p158 = pneg %p33
        $region26: #{basic_block3x3_ncl.5} parent=23 // pred_check_branch
          %160 = sbr.rel (%p158) target = $region28
        $region27: #{basic_block3x3_ncl.5} parent=23 // pred_region
          %p161 = scmp.lt.s32.totalorder %s13, 1
          %s162 = scalar_select %p161, %s13, 1
          %s163 = smul.addr %s162, 8
          %s164 = scalar_lea.vmem %s0, %s163
        $region28: #{basic_block3x3_ncl.5} parent=23 // pred_fallthru
          _
        // Predicated region
        $region29: #{basic_block3x3_ncl.5} parent=23 // pred_check
          %p165 = pneg %p101
        $region30: #{basic_block3x3_ncl.5} parent=23 // pred_check_branch
          %167 = sbr.rel (%p165) target = $region32
        $region31: #{basic_block3x3_ncl.5} parent=23 // pred_region
          %p168 = scmp.lt.s32.totalorder %s13, 1
          %s169 = scalar_select %p168, %s13, 1
          %s170 = smul.addr %s169, 8
          %s171 = scalar_lea.vmem %s3, %s170
        $region32: #{basic_block3x3_ncl.5} parent=23 // pred_fallthru
          _
      $region24: #{basic_block3x3_ncl.5} parent=5 // pred_fallthru
        _
      %p172 = scmp.le.s32.totalorder 1, %s13
      %p173 = scmp.lt.s32.totalorder %s13, 3
      %p174 = pnand %p172, %p173
      %p175 = pneg %p174
      // Predicated region
      $region33: #{basic_block3x3_ncl.5} parent=5 // pred_check
        _
      $region34: #{basic_block3x3_ncl.5} parent=5 // pred_check_branch
        %177 = sbr.rel (%p174) target = $region36
      $region35: #{basic_block3x3_ncl.5} parent=5 // pred_region
        %s178 = ssub.s32 %s13, 1
        %p179 = scmp.lt.s32.totalorder %s18, 1
        %s180 = scalar_select %p179, %s18, 1
        %s181 = smul.addr %s180, 8
        %s182 = scalar_lea.vmem %s0, %s181
        %p183 = pneg %p39
        %p184 = pneg %p36
        %p185 = pneg %p60
        %p186 = pneg %p57
        %p187 = pneg %p81
        %p188 = pneg %p78
        %p189 = scmp.lt.s32.totalorder %s18, 1
        %s190 = scalar_select %p189, %s18, 1
        %s191 = smul.addr %s190, 8
        %s192 = scalar_lea.vmem %s3, %s191
        %p193 = pneg %p107
        %p194 = pneg %p104
        %p195 = pneg %p133
        %p196 = pneg %p130
        %s197 = sand.u32 %s120, 1
        %s198 = scalar_lea.sflag [#allocation3], %s197
        %s199 = sand.u32 %s120, 1
        %s200 = smul.addr %s199, 8
        %s201 = scalar_lea.vmem [#allocation2], %s200
        %p202 = scmp.lt.s32.totalorder %s18, 1
        %s203 = scalar_select %p202, %s18, 1
        %s204 = smul.addr %s203, 8
        %s205 = scalar_lea.vmem %s0, %s204
        %p206 = scmp.lt.s32.totalorder %s18, 1
        %s207 = scalar_select %p206, %s18, 1
        %s208 = smul.addr %s207, 8
        %s209 = scalar_lea.vmem %s3, %s208
        %v210 = vld [vmem:[%s205] sm:$0xff]
        %v211 = vld [vmem:[%s1] sm:$0xff]
        %213 = vset.pattern.permute.xlu0 0
        %214 = vperm.xlu0 %213, %v211
        %v215 = vpop.permute.xlu0 %214
        %v217 = vmul.f32 %v210, %v215
        %v218 = vld [vmem:[%s2] sm:$0xff]
        %220 = vset.pattern.permute.xlu0 0
        %221 = vperm.xlu0 %220, %v218
        %v222 = vpop.permute.xlu0 %221
        %v224 = vadd.f32 %v217, %v222
        %v225 = vld [vmem:[%s209] sm:$0xff]
        %v226 = vadd.f32 %v224, %v225
        %v227 = vmax.f32 %v226, 0.0
        %vm228 = vcmask 261120
        %229 = vst.msk [vmem:[%s201] sm:$0xff] %vm228, %v227
        %s230 = sand.u32 %s120, 1
        %s231 = scalar_lea.sflag [#allocation3], %s230
        %s232 = sand.u32 %s120, 1
        %s233 = smul.addr %s232, 8
        %s234 = scalar_lea.vmem [#allocation2], %s233
        // Predicated region
        $region37: #{basic_block3x3_ncl.5} parent=35 // pred_check
          %p235 = pneg %p130
        $region38: #{basic_block3x3_ncl.5} parent=35 // pred_check_branch
          %237 = sbr.rel (%p235) target = $region40
        $region39: #{basic_block3x3_ncl.5} parent=35 // pred_region
          %s239 = ssub.s32 128, 128
          %240 = vsyncadd %s231, %s239
          %s241 = smul.addr %s18, 128
          %s242 = scalar_lea.hbm %s4, %s241
          %s244 = sshll.u32 %s234, 4
          %s245 = int_to_ptr.vmem [resolvable:$true] %s244
          %247 = dma.vmem_to_hbm [thread:$0]  %s245, 128, %s242, %s231
        $region40: #{basic_block3x3_ncl.5} parent=35 // pred_fallthru
          _
      $region36: #{basic_block3x3_ncl.5} parent=5 // pred_fallthru
        _
      %p248 = scmp.le.s32.totalorder 2, %s13
      // Predicated region
      $region41: #{basic_block3x3_ncl.5} parent=5 // pred_check
        %p249 = pneg %p248
      $region42: #{basic_block3x3_ncl.5} parent=5 // pred_check_branch
        %251 = sbr.rel (%p249) target = $region44
      $region43: #{basic_block3x3_ncl.5} parent=5 // pred_region
        %s252 = ssub.s32 %s13, 2
        // Predicated region
        $region45: #{basic_block3x3_ncl.5} parent=43 // pred_check
          %p253 = pneg %p136
        $region46: #{basic_block3x3_ncl.5} parent=43 // pred_check_branch
          %255 = sbr.rel (%p253) target = $region48
        $region47: #{basic_block3x3_ncl.5} parent=43 // pred_region
          %s256 = sand.u32 %s121, 1
          %s257 = scalar_lea.sflag [#allocation3], %s256
          %s258 = sand.u32 %s121, 1
          %s259 = smul.addr %s258, 8
          %s260 = scalar_lea.vmem [#allocation2], %s259
          %261 = dma.done %s257, 128
        $region48: #{basic_block3x3_ncl.5} parent=43 // pred_fallthru
          _
      $region44: #{basic_block3x3_ncl.5} parent=5 // pred_fallthru
        _
    $region6: #{basic_block3x3_ncl.5} parent=1 // loop_footer
      %s17 = sadd.s32 1, %s13
    $region7: #{basic_block3x3_ncl.5} parent=1 // loop_footer_branch
      %12 = sbr.rel target = $region3
    $region8: #{basic_block3x3_ncl.5} parent=1 // loop_exit
      _
    %262 = vsyncpa [#allocation3], 1
    %s263 = scalar_lea.sflag [#allocation3], 1
    %264 = vsyncpa %s263, 1

// kernel: basic_block3x3_ncl.3
$region0: #{basic_block3x3_ncl.3}
  #allocation0 [shape = 'u32[]', space=smem, size = 0x4, offset = 0x4, fixed_abs, tag = 'smem constant byte address 0x4 - core index']
  #allocation1 [shape = 'u32[144,128]{1,0:T(1,128)}', space=vmem, size = 0x12000, scoped, tag = 'internal scratch']
  %s0 = inlined_call_operand.vmem [shape: f32[2,8,32], index: 0, kind: input, shape index: {}]
  %s1 = inlined_call_operand.vmem [shape: bf16[3,8,8], index: 1, kind: input, shape index: {}]
  %s2 = inlined_call_operand.vmem [shape: f32[2,8,32], index: 2, kind: output, shape index: {0}]
  %s3 = inlined_call_operand.vmem [shape: f32[2,8,1], index: 3, kind: output, shape index: {1}]
  %s4 = inlined_call_operand.vmem [shape: f32[2,8,1], index: 4, kind: output, shape index: {2}]
  %5 = xla_tuple %s2, %s3, %s4
  %s6 = sld [smem:[#allocation0]]
  $region57: #{basic_block3x3_ncl.3} parent=0
    _
  %s8 = ssub.s32 1, %s6
  %s9 = scalar_select 0, %s8, %s6
  loop: start=0, step=1, limit=4
  $region2: #{basic_block3x3_ncl.3} parent=0 // loop_pre_header
    _
  $region3: #{basic_block3x3_ncl.3} parent=0 // loop_header
    %s11 = sphi 0, %s15
    %p12 = scmp.ge.s32.totalorder %s11, 4
    %s21 = sphi 0, %s23
    %s24 = sphi 0, %s21
    %s25 = sphi 0, %s24
    %s41 = sphi 0, %s25
    %s45 = sphi 0, %s45
    %s47 = sphi 0, %s45
    %s48 = sphi 0, %s47
    %s62 = sphi 0, %s48
    %s68 = sphi 0, %s70
    %s71 = sphi 0, %s68
    %s72 = sphi 0, %s71
    %s88 = sphi 0, %s72
    %s94 = sphi 0, %s96
    %s97 = sphi 0, %s94
    %s98 = sphi 0, %s97
    %s114 = sphi 0, %s98
    %s120 = sphi 0, %s122
    %s123 = sphi 0, %s120
    %s124 = sphi 0, %s123
    %s140 = sphi 0, %s124
  $region4: #{basic_block3x3_ncl.3} parent=0 // loop_header_branch
    %14 = sbr.rel (%p12) target = $region8
  $region5: #{basic_block3x3_ncl.3} parent=0 // loop_body
    %s16 = ssub.s32 %s11, 1
    %s17 = ssub.s32 %s11, 2
    %s18 = sadd.s32 %s11, 1
    %s19 = ssub.s32 %s11, %s18
    %p20 = scmp.eq.s32.totalorder %s19, 0
    %s22 = sadd.s32 %s21, 1
    %s23 = scalar_select %p20, %s21, %s22
    %p26 = pneg %p20
    %p27 = scmp.eq.s32.totalorder %s11, 1
    %p28 = por %p26, %p27
    %p29 = scmp.ne.s32.totalorder %s21, %s24
    %p30 = scmp.eq.s32.totalorder %s11, 0
    %p31 = por %p29, %p30
    %p32 = scmp.ne.s32.totalorder %s21, %s24
    %p33 = scmp.eq.s32.totalorder %s16, 1
    %p34 = por %p32, %p33
    %p35 = scmp.ne.s32.totalorder %s24, %s25
    %p36 = scmp.eq.s32.totalorder %s16, 0
    %p37 = por %p35, %p36
    %p38 = scmp.ne.s32.totalorder %s24, %s25
    %p39 = scmp.eq.s32.totalorder %s17, 1
    %p40 = por %p38, %p39
    %p42 = scmp.ne.s32.totalorder %s25, %s41
    %p43 = scmp.eq.s32.totalorder %s17, 0
    %p44 = por %p42, %p43
    %s46 = sadd.s32 %s45, 1
    %p49 = scmp.eq.s32.totalorder %s11, 1
    %p50 = scmp.ne.s32.totalorder %s45, %s47
    %p51 = scmp.eq.s32.totalorder %s11, 0
    %p52 = por %p50, %p51
    %p53 = scmp.ne.s32.totalorder %s45, %s47
    %p54 = scmp.eq.s32.totalorder %s16, 1
    %p55 = por %p53, %p54
    %p56 = scmp.ne.s32.totalorder %s47, %s48
    %p57 = scmp.eq.s32.totalorder %s16, 0
    %p58 = por %p56, %p57
    %p59 = scmp.ne.s32.totalorder %s47, %s48
    %p60 = scmp.eq.s32.totalorder %s17, 1
    %p61 = por %p59, %p60
    %p63 = scmp.ne.s32.totalorder %s48, %s62
    %p64 = scmp.eq.s32.totalorder %s17, 0
    %p65 = por %p63, %p64
    %s66 = ssub.s32 %s11, %s18
    %p67 = scmp.eq.s32.totalorder %s66, 0
    %s69 = sadd.s32 %s68, 1
    %s70 = scalar_select %p67, %s68, %s69
    %p73 = pneg %p67
    %p74 = scmp.eq.s32.totalorder %s11, 1
    %p75 = por %p73, %p74
    %p76 = scmp.ne.s32.totalorder %s68, %s71
    %p77 = scmp.eq.s32.totalorder %s11, 0
    %p78 = por %p76, %p77
    %p79 = scmp.ne.s32.totalorder %s68, %s71
    %p80 = scmp.eq.s32.totalorder %s16, 1
    %p81 = por %p79, %p80
    %p82 = scmp.ne.s32.totalorder %s71, %s72
    %p83 = scmp.eq.s32.totalorder %s16, 0
    %p84 = por %p82, %p83
    %p85 = scmp.ne.s32.totalorder %s71, %s72
    %p86 = scmp.eq.s32.totalorder %s17, 1
    %p87 = por %p85, %p86
    %p89 = scmp.ne.s32.totalorder %s72, %s88
    %p90 = scmp.eq.s32.totalorder %s17, 0
    %p91 = por %p89, %p90
    %s92 = ssub.s32 %s11, %s18
    %p93 = scmp.eq.s32.totalorder %s92, 0
    %s95 = sadd.s32 %s94, 1
    %s96 = scalar_select %p93, %s94, %s95
    %p99 = pneg %p93
    %p100 = scmp.eq.s32.totalorder %s11, 1
    %p101 = por %p99, %p100
    %p102 = scmp.ne.s32.totalorder %s94, %s97
    %p103 = scmp.eq.s32.totalorder %s11, 0
    %p104 = por %p102, %p103
    %p105 = scmp.ne.s32.totalorder %s94, %s97
    %p106 = scmp.eq.s32.totalorder %s16, 1
    %p107 = por %p105, %p106
    %p108 = scmp.ne.s32.totalorder %s97, %s98
    %p109 = scmp.eq.s32.totalorder %s16, 0
    %p110 = por %p108, %p109
    %p111 = scmp.ne.s32.totalorder %s97, %s98
    %p112 = scmp.eq.s32.totalorder %s17, 1
    %p113 = por %p111, %p112
    %p115 = scmp.ne.s32.totalorder %s98, %s114
    %p116 = scmp.eq.s32.totalorder %s17, 0
    %p117 = por %p115, %p116
    %s118 = ssub.s32 %s11, %s18
    %p119 = scmp.eq.s32.totalorder %s118, 0
    %s121 = sadd.s32 %s120, 1
    %s122 = scalar_select %p119, %s120, %s121
    %p125 = pneg %p119
    %p126 = scmp.eq.s32.totalorder %s11, 1
    %p127 = por %p125, %p126
    %p128 = scmp.ne.s32.totalorder %s120, %s123
    %p129 = scmp.eq.s32.totalorder %s11, 0
    %p130 = por %p128, %p129
    %p131 = scmp.ne.s32.totalorder %s120, %s123
    %p132 = scmp.eq.s32.totalorder %s16, 1
    %p133 = por %p131, %p132
    %p134 = scmp.ne.s32.totalorder %s123, %s124
    %p135 = scmp.eq.s32.totalorder %s16, 0
    %p136 = por %p134, %p135
    %p137 = scmp.ne.s32.totalorder %s123, %s124
    %p138 = scmp.eq.s32.totalorder %s17, 1
    %p139 = por %p137, %p138
    %p141 = scmp.ne.s32.totalorder %s124, %s140
    %p142 = scmp.eq.s32.totalorder %s17, 0
    %p143 = por %p141, %p142
    %p144 = scmp.le.s32.totalorder 1, %s11
    %p145 = scmp.lt.s32.totalorder %s11, 3
    %p146 = pnand %p144, %p145
    %p147 = pneg %p146
    // Predicated region
    $region9: #{basic_block3x3_ncl.3} parent=5 // pred_check
      _
    $region10: #{basic_block3x3_ncl.3} parent=5 // pred_check_branch
      %149 = sbr.rel (%p146) target = $region12
    $region11: #{basic_block3x3_ncl.3} parent=5 // pred_region
      %s150 = ssub.s32 %s11, 1
      // Predicated region
      $region13: #{basic_block3x3_ncl.3} parent=11 // pred_check
        %p151 = pneg %p58
      $region14: #{basic_block3x3_ncl.3} parent=11 // pred_check_branch
        %153 = sbr.rel (%p151) target = $region16
      $region15: #{basic_block3x3_ncl.3} parent=11 // pred_region
        _
      $region16: #{basic_block3x3_ncl.3} parent=11 // pred_fallthru
        _
    $region12: #{basic_block3x3_ncl.3} parent=5 // pred_fallthru
      _
    %p154 = scmp.lt.s32.totalorder %s11, 2
    // Predicated region
    $region17: #{basic_block3x3_ncl.3} parent=5 // pred_check
      %p155 = pneg %p154
    $region18: #{basic_block3x3_ncl.3} parent=5 // pred_check_branch
      %157 = sbr.rel (%p155) target = $region20
    $region19: #{basic_block3x3_ncl.3} parent=5 // pred_region
      // Predicated region
      $region21: #{basic_block3x3_ncl.3} parent=19 // pred_check
        %p158 = pneg %p31
      $region22: #{basic_block3x3_ncl.3} parent=19 // pred_check_branch
        %160 = sbr.rel (%p158) target = $region24
      $region23: #{basic_block3x3_ncl.3} parent=19 // pred_region
        %p161 = scmp.lt.s32.totalorder %s11, 1
        %s162 = scalar_select %p161, %s11, 1
        %s163 = smul.addr %s162, 8
        %s164 = scalar_lea.vmem %s0, %s163
      $region24: #{basic_block3x3_ncl.3} parent=19 // pred_fallthru
        _
    $region20: #{basic_block3x3_ncl.3} parent=5 // pred_fallthru
      _
    %p165 = scmp.le.s32.totalorder 1, %s11
    %p166 = scmp.lt.s32.totalorder %s11, 3
    %p167 = pnand %p165, %p166
    %p168 = pneg %p167
    // Predicated region
    $region25: #{basic_block3x3_ncl.3} parent=5 // pred_check
      _
    $region26: #{basic_block3x3_ncl.3} parent=5 // pred_check_branch
      %170 = sbr.rel (%p167) target = $region28
    $region27: #{basic_block3x3_ncl.3} parent=5 // pred_region
      %s171 = ssub.s32 %s11, 1
      %p172 = scmp.lt.s32.totalorder %s16, 1
      %s173 = scalar_select %p172, %s16, 1
      %s174 = smul.addr %s173, 8
      %s175 = scalar_lea.vmem %s0, %s174
      %p176 = pneg %p37
      %p177 = pneg %p34
      %p178 = pneg %p58
      %p179 = pneg %p55
      %p180 = pneg %p84
      %p181 = pneg %p81
      %p182 = scmp.lt.s32.totalorder %s16, 1
      %s183 = scalar_select %p182, %s16, 1
      %s184 = smul.addr %s183, 8
      %s185 = scalar_lea.vmem %s2, %s184
      %p186 = pneg %p110
      %p187 = pneg %p107
      %p188 = scmp.lt.s32.totalorder %s16, 1
      %s189 = scalar_select %p188, %s16, 1
      %s190 = smul.addr %s189, 8
      %s191 = scalar_lea.vmem %s3, %s190
      %p192 = pneg %p136
      %p193 = pneg %p133
      %p194 = scmp.lt.s32.totalorder %s16, 1
      %s195 = scalar_select %p194, %s16, 1
      %s196 = smul.addr %s195, 8
      %s197 = scalar_lea.vmem %s4, %s196
      %p198 = scmp.lt.s32.totalorder %s16, 1
      %s199 = scalar_select %p198, %s16, 1
      %s200 = smul.addr %s199, 8
      %s201 = scalar_lea.vmem %s0, %s200
      %p202 = scmp.lt.s32.totalorder %s16, 1
      %s203 = scalar_select %p202, %s16, 1
      %s204 = smul.addr %s203, 8
      %s205 = scalar_lea.vmem %s2, %s204
      %p206 = scmp.lt.s32.totalorder %s16, 1
      %s207 = scalar_select %p206, %s16, 1
      %s208 = smul.addr %s207, 8
      %s209 = scalar_lea.vmem %s3, %s208
      %p210 = scmp.lt.s32.totalorder %s16, 1
      %s211 = scalar_select %p210, %s16, 1
      %s212 = smul.addr %s211, 8
      %s213 = scalar_lea.vmem %s4, %s212
      %v215 = vlaneseq
      %v216 = vand.u32 %v215, 127
      %vm217 = vcmp.eq.s32.totalorder %v216, 0
      %vm218 = vcmp.eq.s32.totalorder %v216, 31
      %v219 = vld [vmem:[%s201] sm:$0xff]
      %vm220 = vcmask 1047808
      %221 = vrot.lane.b32.xlu0 %v219, 32
      %v222 = vpop.permute.xlu0 %221
      %v223 = vsel %vm220, %v222, %v219
      %224 = vrot.lane.b32.xlu0 %v223, 32
      %v225 = vpop.permute.xlu0 %224
      %v226 = vsel %vm220, %v225, %v219
      %v227 = vsel %vm217, 1, 0
      %vm228 = vcmp.eq.s32.totalorder %v227, 1
      %230 = vrot.lane.b32.xlu0 %v226, 97
      %v231 = vpop.permute.xlu0 %230
      %v233 = vsel %vm228, 0.0, %v231
      %v234 = vsel %vm218, 1, 0
      %vm235 = vcmp.eq.s32.totalorder %v234, 1
      %236 = vrot.lane.b32.xlu0 %v226, 127
      %v237 = vpop.permute.xlu0 %236
      %v239 = vsel %vm235, 0.0, %v237
      %v240 = vld [vmem:[%s1] sm:$0xf]
      %v241 = vpack.c.bf16 %v233, %v233
      %s242 = scalar_lea.vmem %s1, 4
      %v243 = vld [vmem:[%s242] sm:$0xf]
      %v244 = vpack.c.bf16 %v219, %v219
      %vm245 = vcmask 64512
      %v247 = vsel %vm245, %v243, 0
      %vm249 = vcmask 1043456
      %v251 = vsel %vm249, %v244, 0
      %253 = vmatprep.subr.bf16.mxu0 0
      %254 = vmatpush1.bf16.msra.mxu0 %v251
      %255 = vmatprep.subr.bf16.mxu0 0
      %256 = vmatpush1.bf16.msra.mxu0 0
      %257 = vmatprep.subr.bf16.mxu0 0
      %258 = vmatpush1.bf16.msra.mxu0 0
      %259 = vmatprep.subr.bf16.mxu0 0
      %260 = vmatpush1.bf16.msra.mxu0 0
      %261 = vmatprep.subr.bf16.mxu0 0
      %262 = vmatpush1.bf16.msra.mxu0 0
      %263 = vmatprep.subr.bf16.mxu0 0
      %264 = vmatpush1.bf16.msra.mxu0 0
      %265 = vmatprep.subr.bf16.mxu0 0
      %266 = vmatpush1.bf16.msra.mxu0 0
      %267 = vmatprep.subr.bf16.mxu0 0
      %268 = vmatpush1.bf16.msra.mxu0 0
      %269 = vmatprep.subr.bf16.mxu0 0
      %270 = vmatpush1.bf16.msra.mxu0 0
      %271 = vmatprep.subr.bf16.mxu0 0
      %272 = vmatpush1.bf16.msra.mxu0 0
      %273 = vmatprep.subr.bf16.mxu0 0
      %274 = vmatpush1.bf16.msra.mxu0 0
      %275 = vmatprep.subr.bf16.mxu0 0
      %276 = vmatpush1.bf16.msra.mxu0 0
      %277 = vmatprep.subr.bf16.mxu0 0
      %278 = vmatpush1.bf16.msra.mxu0 0
      %279 = vmatprep.subr.bf16.mxu0 0
      %280 = vmatpush1.bf16.msra.mxu0 0
      %281 = vmatprep.subr.bf16.mxu0 0
      %282 = vmatpush1.bf16.msra.mxu0 0
      %283 = vmatprep.subr.bf16.mxu0 0
      %284 = vmatpush1.bf16.msra.mxu0 0
      %285 = vmatprep.mubr.bf16.mxu0 0
      %286 = vmatmul.mubr.bf16.gmra.mrb[0].mxu0 %v247
      %v287 = vpop.f32.mrb[0].mxu0
      %v288 = vadd.f32 0.0, %v287
      %v289 = vpop.f32.mrb[0].mxu0
      %v290 = vpop.f32.mrb[0].mxu0
      %v291 = vpop.f32.mrb[0].mxu0
      %292 = vdwg.mxu0
      %v294 = vsel %vm245, %v240, 0
      %v297 = vsel %vm249, %v241, 0
      %299 = vmatprep.subr.bf16.mxu0 0
      %300 = vmatpush1.bf16.msra.mxu0 %v297
      %301 = vmatprep.subr.bf16.mxu0 0
      %302 = vmatpush1.bf16.msra.mxu0 0
      %303 = vmatprep.subr.bf16.mxu0 0
      %304 = vmatpush1.bf16.msra.mxu0 0
      %305 = vmatprep.subr.bf16.mxu0 0
      %306 = vmatpush1.bf16.msra.mxu0 0
      %307 = vmatprep.subr.bf16.mxu0 0
      %308 = vmatpush1.bf16.msra.mxu0 0
      %309 = vmatprep.subr.bf16.mxu0 0
      %310 = vmatpush1.bf16.msra.mxu0 0
      %311 = vmatprep.subr.bf16.mxu0 0
      %312 = vmatpush1.bf16.msra.mxu0 0
      %313 = vmatprep.subr.bf16.mxu0 0
      %314 = vmatpush1.bf16.msra.mxu0 0
      %315 = vmatprep.subr.bf16.mxu0 0
      %316 = vmatpush1.bf16.msra.mxu0 0
      %317 = vmatprep.subr.bf16.mxu0 0
      %318 = vmatpush1.bf16.msra.mxu0 0
      %319 = vmatprep.subr.bf16.mxu0 0
      %320 = vmatpush1.bf16.msra.mxu0 0
      %321 = vmatprep.subr.bf16.mxu0 0
      %322 = vmatpush1.bf16.msra.mxu0 0
      %323 = vmatprep.subr.bf16.mxu0 0
      %324 = vmatpush1.bf16.msra.mxu0 0
      %325 = vmatprep.subr.bf16.mxu0 0
      %326 = vmatpush1.bf16.msra.mxu0 0
      %327 = vmatprep.subr.bf16.mxu0 0
      %328 = vmatpush1.bf16.msra.mxu0 0
      %329 = vmatprep.subr.bf16.mxu0 0
      %330 = vmatpush1.bf16.msra.mxu0 0
      %331 = vmatprep.mubr.bf16.mxu0 0
      %332 = vmatmul.mubr.bf16.gmra.mrb[0].mxu0 %v294
      %v333 = vpop.f32.mrb[0].mxu0
      %v334 = vadd.f32 %v288, %v333
      %v335 = vpop.f32.mrb[0].mxu0
      %v336 = vpop.f32.mrb[0].mxu0
      %v337 = vpop.f32.mrb[0].mxu0
      %338 = vdwg.mxu0
      %s339 = scalar_lea.vmem %s1, 8
      %v340 = vld [vmem:[%s339] sm:$0xf]
      %v341 = vpack.c.bf16 %v239, %v239
      %v343 = vsel %vm245, %v340, 0
      %v346 = vsel %vm249, %v341, 0
      %348 = vmatprep.subr.bf16.mxu0 0
      %349 = vmatpush1.bf16.msra.mxu0 %v346
      %350 = vmatprep.subr.bf16.mxu0 0
      %351 = vmatpush1.bf16.msra.mxu0 0
      %352 = vmatprep.subr.bf16.mxu0 0
      %353 = vmatpush1.bf16.msra.mxu0 0
      %354 = vmatprep.subr.bf16.mxu0 0
      %355 = vmatpush1.bf16.msra.mxu0 0
      %356 = vmatprep.subr.bf16.mxu0 0
      %357 = vmatpush1.bf16.msra.mxu0 0
      %358 = vmatprep.subr.bf16.mxu0 0
      %359 = vmatpush1.bf16.msra.mxu0 0
      %360 = vmatprep.subr.bf16.mxu0 0
      %361 = vmatpush1.bf16.msra.mxu0 0
      %362 = vmatprep.subr.bf16.mxu0 0
      %363 = vmatpush1.bf16.msra.mxu0 0
      %364 = vmatprep.subr.bf16.mxu0 0
      %365 = vmatpush1.bf16.msra.mxu0 0
      %366 = vmatprep.subr.bf16.mxu0 0
      %367 = vmatpush1.bf16.msra.mxu0 0
      %368 = vmatprep.subr.bf16.mxu0 0
      %369 = vmatpush1.bf16.msra.mxu0 0
      %370 = vmatprep.subr.bf16.mxu0 0
      %371 = vmatpush1.bf16.msra.mxu0 0
      %372 = vmatprep.subr.bf16.mxu0 0
      %373 = vmatpush1.bf16.msra.mxu0 0
      %374 = vmatprep.subr.bf16.mxu0 0
      %375 = vmatpush1.bf16.msra.mxu0 0
      %376 = vmatprep.subr.bf16.mxu0 0
      %377 = vmatpush1.bf16.msra.mxu0 0
      %378 = vmatprep.subr.bf16.mxu0 0
      %379 = vmatpush1.bf16.msra.mxu0 0
      %380 = vmatprep.mubr.bf16.mxu0 0
      %381 = vmatmul.mubr.bf16.gmra.mrb[0].mxu0 %v343
      %v382 = vpop.f32.mrb[0].mxu0
      %v383 = vadd.f32 0.0, %v382
      %v384 = vpop.f32.mrb[0].mxu0
      %v385 = vpop.f32.mrb[0].mxu0
      %v386 = vpop.f32.mrb[0].mxu0
      %387 = vdwg.mxu0
      %v388 = vadd.f32 %v334, %v383
      %vm389 = vcmask 261120
      %390 = vst.msk [vmem:[%s205] sm:$0xff] %vm389, %v388
      %v391 = vsel %vm389, %v388, 0.0
      %392 = vadd.xlane.f32.xlu0 %v391
      %v393 = vpop.xlane.xlu0 %392
      %vm394 = vcmask 7168
      %395 = vst.msk [vmem:[%s209] sm:$0xff] %vm394, %v393
      %v396 = vmul.f32 %v388, %v388
      %v397 = vsel %vm389, %v396, 0.0
      %398 = vadd.xlane.f32.xlu0 %v397
      %v399 = vpop.xlane.xlu0 %398
      %400 = vst.msk [vmem:[%s213] sm:$0xff] %vm394, %v399
      %p401 = scmp.lt.s32.totalorder %s16, 1
      %s402 = scalar_select %p401, %s16, 1
      %s403 = smul.addr %s402, 8
      %s404 = scalar_lea.vmem %s2, %s403
      %p405 = scmp.lt.s32.totalorder %s16, 1
      %s406 = scalar_select %p405, %s16, 1
      %s407 = smul.addr %s406, 8
      %s408 = scalar_lea.vmem %s3, %s407
      %p409 = scmp.lt.s32.totalorder %s16, 1
      %s410 = scalar_select %p409, %s16, 1
      %s411 = smul.addr %s410, 8
      %s412 = scalar_lea.vmem %s4, %s411
      // Predicated region
      $region29: #{basic_block3x3_ncl.3} parent=27 // pred_check
        %p413 = pneg %p81
      $region30: #{basic_block3x3_ncl.3} parent=27 // pred_check_branch
        %415 = sbr.rel (%p413) target = $region32
      $region31: #{basic_block3x3_ncl.3} parent=27 // pred_region
        _
      $region32: #{basic_block3x3_ncl.3} parent=27 // pred_fallthru
        _
      // Predicated region
      $region33: #{basic_block3x3_ncl.3} parent=27 // pred_check
        %p416 = pneg %p107
      $region34: #{basic_block3x3_ncl.3} parent=27 // pred_check_branch
        %418 = sbr.rel (%p416) target = $region36
      $region35: #{basic_block3x3_ncl.3} parent=27 // pred_region
        _
      $region36: #{basic_block3x3_ncl.3} parent=27 // pred_fallthru
        _
      // Predicated region
      $region37: #{basic_block3x3_ncl.3} parent=27 // pred_check
        %p419 = pneg %p133
      $region38: #{basic_block3x3_ncl.3} parent=27 // pred_check_branch
        %421 = sbr.rel (%p419) target = $region40
      $region39: #{basic_block3x3_ncl.3} parent=27 // pred_region
        _
      $region40: #{basic_block3x3_ncl.3} parent=27 // pred_fallthru
        _
    $region28: #{basic_block3x3_ncl.3} parent=5 // pred_fallthru
      _
    %p422 = scmp.le.s32.totalorder 2, %s11
    // Predicated region
    $region41: #{basic_block3x3_ncl.3} parent=5 // pred_check
      %p423 = pneg %p422
    $region42: #{basic_block3x3_ncl.3} parent=5 // pred_check_branch
      %425 = sbr.rel (%p423) target = $region44
    $region43: #{basic_block3x3_ncl.3} parent=5 // pred_region
      %s426 = ssub.s32 %s11, 2
      // Predicated region
      $region45: #{basic_block3x3_ncl.3} parent=43 // pred_check
        %p427 = pneg %p87
      $region46: #{basic_block3x3_ncl.3} parent=43 // pred_check_branch
        %429 = sbr.rel (%p427) target = $region48
      $region47: #{basic_block3x3_ncl.3} parent=43 // pred_region
        %p430 = scmp.lt.s32.totalorder %s17, 1
        %s431 = scalar_select %p430, %s17, 1
        %s432 = smul.addr %s431, 8
        %s433 = scalar_lea.vmem %s2, %s432
      $region48: #{basic_block3x3_ncl.3} parent=43 // pred_fallthru
        _
      // Predicated region
      $region49: #{basic_block3x3_ncl.3} parent=43 // pred_check
        %p434 = pneg %p113
      $region50: #{basic_block3x3_ncl.3} parent=43 // pred_check_branch
        %436 = sbr.rel (%p434) target = $region52
      $region51: #{basic_block3x3_ncl.3} parent=43 // pred_region
        %p437 = scmp.lt.s32.totalorder %s17, 1
        %s438 = scalar_select %p437, %s17, 1
        %s439 = smul.addr %s438, 8
        %s440 = scalar_lea.vmem %s3, %s439
      $region52: #{basic_block3x3_ncl.3} parent=43 // pred_fallthru
        _
      // Predicated region
      $region53: #{basic_block3x3_ncl.3} parent=43 // pred_check
        %p441 = pneg %p139
      $region54: #{basic_block3x3_ncl.3} parent=43 // pred_check_branch
        %443 = sbr.rel (%p441) target = $region56
      $region55: #{basic_block3x3_ncl.3} parent=43 // pred_region
        %p444 = scmp.lt.s32.totalorder %s17, 1
        %s445 = scalar_select %p444, %s17, 1
        %s446 = smul.addr %s445, 8
        %s447 = scalar_lea.vmem %s4, %s446
      $region56: #{basic_block3x3_ncl.3} parent=43 // pred_fallthru
        _
    $region44: #{basic_block3x3_ncl.3} parent=5 // pred_fallthru
      _
  $region6: #{basic_block3x3_ncl.3} parent=0 // loop_footer
    %s15 = sadd.s32 1, %s11
  $region7: #{basic_block3x3_ncl.3} parent=0 // loop_footer_branch
    %10 = sbr.rel target = $region3
  $region8: #{basic_block3x3_ncl.3} parent=0 // loop_exit
    _

// kernel: basic_block3x3_ncl.4
$region0: #{basic_block3x3_ncl.4}
  #allocation0 [shape = 'u32[]', space=smem, size = 0x4, offset = 0x4, fixed_abs, tag = 'smem constant byte address 0x4 - core index']
  #allocation1 [shape = 'u32[144,128]{1,0:T(1,128)}', space=vmem, size = 0x12000, scoped, tag = 'internal scratch']
  %s0 = inlined_call_operand.vmem [shape: f32[2,8,32], index: 0, kind: input, shape index: {}]
  %s1 = inlined_call_operand.vmem [shape: f32[8,1], index: 1, kind: input, shape index: {}]
  %s2 = inlined_call_operand.vmem [shape: f32[8,1], index: 2, kind: input, shape index: {}]
  %s3 = inlined_call_operand.vmem [shape: bf16[3,8,8], index: 3, kind: input, shape index: {}]
  %s4 = inlined_call_operand.vmem [shape: f32[2,8,32], index: 4, kind: output, shape index: {0}]
  %s5 = inlined_call_operand.vmem [shape: f32[2,8,1], index: 5, kind: output, shape index: {1}]
  %s6 = inlined_call_operand.vmem [shape: f32[2,8,1], index: 6, kind: output, shape index: {2}]
  %7 = xla_tuple %s4, %s5, %s6
  %s8 = sld [smem:[#allocation0]]
  $region65: #{basic_block3x3_ncl.4} parent=0
    _
  %s10 = ssub.s32 1, %s8
  %s11 = scalar_select 0, %s10, %s8
  loop: start=0, step=1, limit=4
  $region2: #{basic_block3x3_ncl.4} parent=0 // loop_pre_header
    _
  $region3: #{basic_block3x3_ncl.4} parent=0 // loop_header
    %s13 = sphi 0, %s17
    %p14 = scmp.ge.s32.totalorder %s13, 4
    %s23 = sphi 0, %s25
    %s26 = sphi 0, %s23
    %s27 = sphi 0, %s26
    %s43 = sphi 0, %s27
    %s47 = sphi 0, %s47
    %s49 = sphi 0, %s47
    %s50 = sphi 0, %s49
    %s64 = sphi 0, %s50
    %s68 = sphi 0, %s68
    %s70 = sphi 0, %s68
    %s71 = sphi 0, %s70
    %s85 = sphi 0, %s71
    %s89 = sphi 0, %s89
    %s91 = sphi 0, %s89
    %s92 = sphi 0, %s91
    %s106 = sphi 0, %s92
    %s112 = sphi 0, %s114
    %s115 = sphi 0, %s112
    %s116 = sphi 0, %s115
    %s132 = sphi 0, %s116
    %s138 = sphi 0, %s140
    %s141 = sphi 0, %s138
    %s142 = sphi 0, %s141
    %s158 = sphi 0, %s142
    %s164 = sphi 0, %s166
    %s167 = sphi 0, %s164
    %s168 = sphi 0, %s167
    %s184 = sphi 0, %s168
  $region4: #{basic_block3x3_ncl.4} parent=0 // loop_header_branch
    %16 = sbr.rel (%p14) target = $region8
  $region5: #{basic_block3x3_ncl.4} parent=0 // loop_body
    %s18 = ssub.s32 %s13, 1
    %s19 = ssub.s32 %s13, 2
    %s20 = sadd.s32 %s13, 1
    %s21 = ssub.s32 %s13, %s20
    %p22 = scmp.eq.s32.totalorder %s21, 0
    %s24 = sadd.s32 %s23, 1
    %s25 = scalar_select %p22, %s23, %s24
    %p28 = pneg %p22
    %p29 = scmp.eq.s32.totalorder %s13, 1
    %p30 = por %p28, %p29
    %p31 = scmp.ne.s32.totalorder %s23, %s26
    %p32 = scmp.eq.s32.totalorder %s13, 0
    %p33 = por %p31, %p32
    %p34 = scmp.ne.s32.totalorder %s23, %s26
    %p35 = scmp.eq.s32.totalorder %s18, 1
    %p36 = por %p34, %p35
    %p37 = scmp.ne.s32.totalorder %s26, %s27
    %p38 = scmp.eq.s32.totalorder %s18, 0
    %p39 = por %p37, %p38
    %p40 = scmp.ne.s32.totalorder %s26, %s27
    %p41 = scmp.eq.s32.totalorder %s19, 1
    %p42 = por %p40, %p41
    %p44 = scmp.ne.s32.totalorder %s27, %s43
    %p45 = scmp.eq.s32.totalorder %s19, 0
    %p46 = por %p44, %p45
    %s48 = sadd.s32 %s47, 1
    %p51 = scmp.eq.s32.totalorder %s13, 1
    %p52 = scmp.ne.s32.totalorder %s47, %s49
    %p53 = scmp.eq.s32.totalorder %s13, 0
    %p54 = por %p52, %p53
    %p55 = scmp.ne.s32.totalorder %s47, %s49
    %p56 = scmp.eq.s32.totalorder %s18, 1
    %p57 = por %p55, %p56
    %p58 = scmp.ne.s32.totalorder %s49, %s50
    %p59 = scmp.eq.s32.totalorder %s18, 0
    %p60 = por %p58, %p59
    %p61 = scmp.ne.s32.totalorder %s49, %s50
    %p62 = scmp.eq.s32.totalorder %s19, 1
    %p63 = por %p61, %p62
    %p65 = scmp.ne.s32.totalorder %s50, %s64
    %p66 = scmp.eq.s32.totalorder %s19, 0
    %p67 = por %p65, %p66
    %s69 = sadd.s32 %s68, 1
    %p72 = scmp.eq.s32.totalorder %s13, 1
    %p73 = scmp.ne.s32.totalorder %s68, %s70
    %p74 = scmp.eq.s32.totalorder %s13, 0
    %p75 = por %p73, %p74
    %p76 = scmp.ne.s32.totalorder %s68, %s70
    %p77 = scmp.eq.s32.totalorder %s18, 1
    %p78 = por %p76, %p77
    %p79 = scmp.ne.s32.totalorder %s70, %s71
    %p80 = scmp.eq.s32.totalorder %s18, 0
    %p81 = por %p79, %p80
    %p82 = scmp.ne.s32.totalorder %s70, %s71
    %p83 = scmp.eq.s32.totalorder %s19, 1
    %p84 = por %p82, %p83
    %p86 = scmp.ne.s32.totalorder %s71, %s85
    %p87 = scmp.eq.s32.totalorder %s19, 0
    %p88 = por %p86, %p87
    %s90 = sadd.s32 %s89, 1
    %p93 = scmp.eq.s32.totalorder %s13, 1
    %p94 = scmp.ne.s32.totalorder %s89, %s91
    %p95 = scmp.eq.s32.totalorder %s13, 0
    %p96 = por %p94, %p95
    %p97 = scmp.ne.s32.totalorder %s89, %s91
    %p98 = scmp.eq.s32.totalorder %s18, 1
    %p99 = por %p97, %p98
    %p100 = scmp.ne.s32.totalorder %s91, %s92
    %p101 = scmp.eq.s32.totalorder %s18, 0
    %p102 = por %p100, %p101
    %p103 = scmp.ne.s32.totalorder %s91, %s92
    %p104 = scmp.eq.s32.totalorder %s19, 1
    %p105 = por %p103, %p104
    %p107 = scmp.ne.s32.totalorder %s92, %s106
    %p108 = scmp.eq.s32.totalorder %s19, 0
    %p109 = por %p107, %p108
    %s110 = ssub.s32 %s13, %s20
    %p111 = scmp.eq.s32.totalorder %s110, 0
    %s113 = sadd.s32 %s112, 1
    %s114 = scalar_select %p111, %s112, %s113
    %p117 = pneg %p111
    %p118 = scmp.eq.s32.totalorder %s13, 1
    %p119 = por %p117, %p118
    %p120 = scmp.ne.s32.totalorder %s112, %s115
    %p121 = scmp.eq.s32.totalorder %s13, 0
    %p122 = por %p120, %p121
    %p123 = scmp.ne.s32.totalorder %s112, %s115
    %p124 = scmp.eq.s32.totalorder %s18, 1
    %p125 = por %p123, %p124
    %p126 = scmp.ne.s32.totalorder %s115, %s116
    %p127 = scmp.eq.s32.totalorder %s18, 0
    %p128 = por %p126, %p127
    %p129 = scmp.ne.s32.totalorder %s115, %s116
    %p130 = scmp.eq.s32.totalorder %s19, 1
    %p131 = por %p129, %p130
    %p133 = scmp.ne.s32.totalorder %s116, %s132
    %p134 = scmp.eq.s32.totalorder %s19, 0
    %p135 = por %p133, %p134
    %s136 = ssub.s32 %s13, %s20
    %p137 = scmp.eq.s32.totalorder %s136, 0
    %s139 = sadd.s32 %s138, 1
    %s140 = scalar_select %p137, %s138, %s139
    %p143 = pneg %p137
    %p144 = scmp.eq.s32.totalorder %s13, 1
    %p145 = por %p143, %p144
    %p146 = scmp.ne.s32.totalorder %s138, %s141
    %p147 = scmp.eq.s32.totalorder %s13, 0
    %p148 = por %p146, %p147
    %p149 = scmp.ne.s32.totalorder %s138, %s141
    %p150 = scmp.eq.s32.totalorder %s18, 1
    %p151 = por %p149, %p150
    %p152 = scmp.ne.s32.totalorder %s141, %s142
    %p153 = scmp.eq.s32.totalorder %s18, 0
    %p154 = por %p152, %p153
    %p155 = scmp.ne.s32.totalorder %s141, %s142
    %p156 = scmp.eq.s32.totalorder %s19, 1
    %p157 = por %p155, %p156
    %p159 = scmp.ne.s32.totalorder %s142, %s158
    %p160 = scmp.eq.s32.totalorder %s19, 0
    %p161 = por %p159, %p160
    %s162 = ssub.s32 %s13, %s20
    %p163 = scmp.eq.s32.totalorder %s162, 0
    %s165 = sadd.s32 %s164, 1
    %s166 = scalar_select %p163, %s164, %s165
    %p169 = pneg %p163
    %p170 = scmp.eq.s32.totalorder %s13, 1
    %p171 = por %p169, %p170
    %p172 = scmp.ne.s32.totalorder %s164, %s167
    %p173 = scmp.eq.s32.totalorder %s13, 0
    %p174 = por %p172, %p173
    %p175 = scmp.ne.s32.totalorder %s164, %s167
    %p176 = scmp.eq.s32.totalorder %s18, 1
    %p177 = por %p175, %p176
    %p178 = scmp.ne.s32.totalorder %s167, %s168
    %p179 = scmp.eq.s32.totalorder %s18, 0
    %p180 = por %p178, %p179
    %p181 = scmp.ne.s32.totalorder %s167, %s168
    %p182 = scmp.eq.s32.totalorder %s19, 1
    %p183 = por %p181, %p182
    %p185 = scmp.ne.s32.totalorder %s168, %s184
    %p186 = scmp.eq.s32.totalorder %s19, 0
    %p187 = por %p185, %p186
    %p188 = scmp.le.s32.totalorder 1, %s13
    %p189 = scmp.lt.s32.totalorder %s13, 3
    %p190 = pnand %p188, %p189
    %p191 = pneg %p190
    // Predicated region
    $region9: #{basic_block3x3_ncl.4} parent=5 // pred_check
      _
    $region10: #{basic_block3x3_ncl.4} parent=5 // pred_check_branch
      %193 = sbr.rel (%p190) target = $region12
    $region11: #{basic_block3x3_ncl.4} parent=5 // pred_region
      %s194 = ssub.s32 %s13, 1
      // Predicated region
      $region13: #{basic_block3x3_ncl.4} parent=11 // pred_check
        %p195 = pneg %p60
      $region14: #{basic_block3x3_ncl.4} parent=11 // pred_check_branch
        %197 = sbr.rel (%p195) target = $region16
      $region15: #{basic_block3x3_ncl.4} parent=11 // pred_region
        _
      $region16: #{basic_block3x3_ncl.4} parent=11 // pred_fallthru
        _
      // Predicated region
      $region17: #{basic_block3x3_ncl.4} parent=11 // pred_check
        %p198 = pneg %p81
      $region18: #{basic_block3x3_ncl.4} parent=11 // pred_check_branch
        %200 = sbr.rel (%p198) target = $region20
      $region19: #{basic_block3x3_ncl.4} parent=11 // pred_region
        _
      $region20: #{basic_block3x3_ncl.4} parent=11 // pred_fallthru
        _
      // Predicated region
      $region21: #{basic_block3x3_ncl.4} parent=11 // pred_check
        %p201 = pneg %p102
      $region22: #{basic_block3x3_ncl.4} parent=11 // pred_check_branch
        %203 = sbr.rel (%p201) target = $region24
      $region23: #{basic_block3x3_ncl.4} parent=11 // pred_region
        _
      $region24: #{basic_block3x3_ncl.4} parent=11 // pred_fallthru
        _
    $region12: #{basic_block3x3_ncl.4} parent=5 // pred_fallthru
      _
    %p204 = scmp.lt.s32.totalorder %s13, 2
    // Predicated region
    $region25: #{basic_block3x3_ncl.4} parent=5 // pred_check
      %p205 = pneg %p204
    $region26: #{basic_block3x3_ncl.4} parent=5 // pred_check_branch
      %207 = sbr.rel (%p205) target = $region28
    $region27: #{basic_block3x3_ncl.4} parent=5 // pred_region
      // Predicated region
      $region29: #{basic_block3x3_ncl.4} parent=27 // pred_check
        %p208 = pneg %p33
      $region30: #{basic_block3x3_ncl.4} parent=27 // pred_check_branch
        %210 = sbr.rel (%p208) target = $region32
      $region31: #{basic_block3x3_ncl.4} parent=27 // pred_region
        %p211 = scmp.lt.s32.totalorder %s13, 1
        %s212 = scalar_select %p211, %s13, 1
        %s213 = smul.addr %s212, 8
        %s214 = scalar_lea.vmem %s0, %s213
      $region32: #{basic_block3x3_ncl.4} parent=27 // pred_fallthru
        _
    $region28: #{basic_block3x3_ncl.4} parent=5 // pred_fallthru
      _
    %p215 = scmp.le.s32.totalorder 1, %s13
    %p216 = scmp.lt.s32.totalorder %s13, 3
    %p217 = pnand %p215, %p216
    %p218 = pneg %p217
    // Predicated region
    $region33: #{basic_block3x3_ncl.4} parent=5 // pred_check
      _
    $region34: #{basic_block3x3_ncl.4} parent=5 // pred_check_branch
      %220 = sbr.rel (%p217) target = $region36
    $region35: #{basic_block3x3_ncl.4} parent=5 // pred_region
      %s221 = ssub.s32 %s13, 1
      %p222 = scmp.lt.s32.totalorder %s18, 1
      %s223 = scalar_select %p222, %s18, 1
      %s224 = smul.addr %s223, 8
      %s225 = scalar_lea.vmem %s0, %s224
      %p226 = pneg %p39
      %p227 = pneg %p36
      %p228 = pneg %p60
      %p229 = pneg %p57
      %p230 = pneg %p81
      %p231 = pneg %p78
      %p232 = pneg %p102
      %p233 = pneg %p99
      %p234 = pneg %p128
      %p235 = pneg %p125
      %p236 = scmp.lt.s32.totalorder %s18, 1
      %s237 = scalar_select %p236, %s18, 1
      %s238 = smul.addr %s237, 8
      %s239 = scalar_lea.vmem %s4, %s238
      %p240 = pneg %p154
      %p241 = pneg %p151
      %p242 = scmp.lt.s32.totalorder %s18, 1
      %s243 = scalar_select %p242, %s18, 1
      %s244 = smul.addr %s243, 8
      %s245 = scalar_lea.vmem %s5, %s244
      %p246 = pneg %p180
      %p247 = pneg %p177
      %p248 = scmp.lt.s32.totalorder %s18, 1
      %s249 = scalar_select %p248, %s18, 1
      %s250 = smul.addr %s249, 8
      %s251 = scalar_lea.vmem %s6, %s250
      %p252 = scmp.lt.s32.totalorder %s18, 1
      %s253 = scalar_select %p252, %s18, 1
      %s254 = smul.addr %s253, 8
      %s255 = scalar_lea.vmem %s0, %s254
      %p256 = scmp.lt.s32.totalorder %s18, 1
      %s257 = scalar_select %p256, %s18, 1
      %s258 = smul.addr %s257, 8
      %s259 = scalar_lea.vmem %s4, %s258
      %p260 = scmp.lt.s32.totalorder %s18, 1
      %s261 = scalar_select %p260, %s18, 1
      %s262 = smul.addr %s261, 8
      %s263 = scalar_lea.vmem %s5, %s262
      %p264 = scmp.lt.s32.totalorder %s18, 1
      %s265 = scalar_select %p264, %s18, 1
      %s266 = smul.addr %s265, 8
      %s267 = scalar_lea.vmem %s6, %s266
      %v269 = vlaneseq
      %v270 = vand.u32 %v269, 127
      %vm271 = vcmp.eq.s32.totalorder %v270, 0
      %vm272 = vcmp.eq.s32.totalorder %v270, 31
      %v273 = vld [vmem:[%s255] sm:$0xff]
      %v274 = vld [vmem:[%s1] sm:$0xff]
      %276 = vset.pattern.permute.xlu0 0
      %277 = vperm.xlu0 %276, %v274
      %v278 = vpop.permute.xlu0 %277
      %v280 = vmul.f32 %v273, %v278
      %v281 = vld [vmem:[%s2] sm:$0xff]
      %283 = vset.pattern.permute.xlu0 0
      %284 = vperm.xlu0 %283, %v281
      %v285 = vpop.permute.xlu0 %284
      %v287 = vadd.f32 %v280, %v285
      %v288 = vmax.f32 %v287, 0.0
      %vm289 = vcmask 1047808
      %290 = vrot.lane.b32.xlu0 %v288, 32
      %v291 = vpop.permute.xlu0 %290
      %v292 = vsel %vm289, %v291, %v288
      %293 = vrot.lane.b32.xlu0 %v292, 32
      %v294 = vpop.permute.xlu0 %293
      %v295 = vsel %vm289, %v294, %v288
      %v296 = vsel %vm271, 1, 0
      %vm297 = vcmp.eq.s32.totalorder %v296, 1
      %299 = vrot.lane.b32.xlu0 %v295, 97
      %v300 = vpop.permute.xlu0 %299
      %v302 = vsel %vm297, 0.0, %v300
      %v303 = vsel %vm272, 1, 0
      %vm304 = vcmp.eq.s32.totalorder %v303, 1
      %305 = vrot.lane.b32.xlu0 %v295, 127
      %v306 = vpop.permute.xlu0 %305
      %v308 = vsel %vm304, 0.0, %v306
      %v309 = vld [vmem:[%s3] sm:$0xf]
      %v310 = vpack.c.bf16 %v302, %v302
      %s311 = scalar_lea.vmem %s3, 4
      %v312 = vld [vmem:[%s311] sm:$0xf]
      %v313 = vpack.c.bf16 %v288, %v288
      %vm314 = vcmask 64512
      %v316 = vsel %vm314, %v312, 0
      %vm318 = vcmask 1043456
      %v320 = vsel %vm318, %v313, 0
      %322 = vmatprep.subr.bf16.mxu0 0
      %323 = vmatpush1.bf16.msra.mxu0 %v320
      %324 = vmatprep.subr.bf16.mxu0 0
      %325 = vmatpush1.bf16.msra.mxu0 0
      %326 = vmatprep.subr.bf16.mxu0 0
      %327 = vmatpush1.bf16.msra.mxu0 0
      %328 = vmatprep.subr.bf16.mxu0 0
      %329 = vmatpush1.bf16.msra.mxu0 0
      %330 = vmatprep.subr.bf16.mxu0 0
      %331 = vmatpush1.bf16.msra.mxu0 0
      %332 = vmatprep.subr.bf16.mxu0 0
      %333 = vmatpush1.bf16.msra.mxu0 0
      %334 = vmatprep.subr.bf16.mxu0 0
      %335 = vmatpush1.bf16.msra.mxu0 0
      %336 = vmatprep.subr.bf16.mxu0 0
      %337 = vmatpush1.bf16.msra.mxu0 0
      %338 = vmatprep.subr.bf16.mxu0 0
      %339 = vmatpush1.bf16.msra.mxu0 0
      %340 = vmatprep.subr.bf16.mxu0 0
      %341 = vmatpush1.bf16.msra.mxu0 0
      %342 = vmatprep.subr.bf16.mxu0 0
      %343 = vmatpush1.bf16.msra.mxu0 0
      %344 = vmatprep.subr.bf16.mxu0 0
      %345 = vmatpush1.bf16.msra.mxu0 0
      %346 = vmatprep.subr.bf16.mxu0 0
      %347 = vmatpush1.bf16.msra.mxu0 0
      %348 = vmatprep.subr.bf16.mxu0 0
      %349 = vmatpush1.bf16.msra.mxu0 0
      %350 = vmatprep.subr.bf16.mxu0 0
      %351 = vmatpush1.bf16.msra.mxu0 0
      %352 = vmatprep.subr.bf16.mxu0 0
      %353 = vmatpush1.bf16.msra.mxu0 0
      %354 = vmatprep.mubr.bf16.mxu0 0
      %355 = vmatmul.mubr.bf16.gmra.mrb[0].mxu0 %v316
      %v356 = vpop.f32.mrb[0].mxu0
      %v357 = vadd.f32 0.0, %v356
      %v358 = vpop.f32.mrb[0].mxu0
      %v359 = vpop.f32.mrb[0].mxu0
      %v360 = vpop.f32.mrb[0].mxu0
      %361 = vdwg.mxu0
      %v363 = vsel %vm314, %v309, 0
      %v366 = vsel %vm318, %v310, 0
      %368 = vmatprep.subr.bf16.mxu0 0
      %369 = vmatpush1.bf16.msra.mxu0 %v366
      %370 = vmatprep.subr.bf16.mxu0 0
      %371 = vmatpush1.bf16.msra.mxu0 0
      %372 = vmatprep.subr.bf16.mxu0 0
      %373 = vmatpush1.bf16.msra.mxu0 0
      %374 = vmatprep.subr.bf16.mxu0 0
      %375 = vmatpush1.bf16.msra.mxu0 0
      %376 = vmatprep.subr.bf16.mxu0 0
      %377 = vmatpush1.bf16.msra.mxu0 0
      %378 = vmatprep.subr.bf16.mxu0 0
      %379 = vmatpush1.bf16.msra.mxu0 0
      %380 = vmatprep.subr.bf16.mxu0 0
      %381 = vmatpush1.bf16.msra.mxu0 0
      %382 = vmatprep.subr.bf16.mxu0 0
      %383 = vmatpush1.bf16.msra.mxu0 0
      %384 = vmatprep.subr.bf16.mxu0 0
      %385 = vmatpush1.bf16.msra.mxu0 0
      %386 = vmatprep.subr.bf16.mxu0 0
      %387 = vmatpush1.bf16.msra.mxu0 0
      %388 = vmatprep.subr.bf16.mxu0 0
      %389 = vmatpush1.bf16.msra.mxu0 0
      %390 = vmatprep.subr.bf16.mxu0 0
      %391 = vmatpush1.bf16.msra.mxu0 0
      %392 = vmatprep.subr.bf16.mxu0 0
      %393 = vmatpush1.bf16.msra.mxu0 0
      %394 = vmatprep.subr.bf16.mxu0 0
      %395 = vmatpush1.bf16.msra.mxu0 0
      %396 = vmatprep.subr.bf16.mxu0 0
      %397 = vmatpush1.bf16.msra.mxu0 0
      %398 = vmatprep.subr.bf16.mxu0 0
      %399 = vmatpush1.bf16.msra.mxu0 0
      %400 = vmatprep.mubr.bf16.mxu0 0
      %401 = vmatmul.mubr.bf16.gmra.mrb[0].mxu0 %v363
      %v402 = vpop.f32.mrb[0].mxu0
      %v403 = vadd.f32 %v357, %v402
      %v404 = vpop.f32.mrb[0].mxu0
      %v405 = vpop.f32.mrb[0].mxu0
      %v406 = vpop.f32.mrb[0].mxu0
      %407 = vdwg.mxu0
      %s408 = scalar_lea.vmem %s3, 8
      %v409 = vld [vmem:[%s408] sm:$0xf]
      %v410 = vpack.c.bf16 %v308, %v308
      %v412 = vsel %vm314, %v409, 0
      %v415 = vsel %vm318, %v410, 0
      %417 = vmatprep.subr.bf16.mxu0 0
      %418 = vmatpush1.bf16.msra.mxu0 %v415
      %419 = vmatprep.subr.bf16.mxu0 0
      %420 = vmatpush1.bf16.msra.mxu0 0
      %421 = vmatprep.subr.bf16.mxu0 0
      %422 = vmatpush1.bf16.msra.mxu0 0
      %423 = vmatprep.subr.bf16.mxu0 0
      %424 = vmatpush1.bf16.msra.mxu0 0
      %425 = vmatprep.subr.bf16.mxu0 0
      %426 = vmatpush1.bf16.msra.mxu0 0
      %427 = vmatprep.subr.bf16.mxu0 0
      %428 = vmatpush1.bf16.msra.mxu0 0
      %429 = vmatprep.subr.bf16.mxu0 0
      %430 = vmatpush1.bf16.msra.mxu0 0
      %431 = vmatprep.subr.bf16.mxu0 0
      %432 = vmatpush1.bf16.msra.mxu0 0
      %433 = vmatprep.subr.bf16.mxu0 0
      %434 = vmatpush1.bf16.msra.mxu0 0
      %435 = vmatprep.subr.bf16.mxu0 0
      %436 = vmatpush1.bf16.msra.mxu0 0
      %437 = vmatprep.subr.bf16.mxu0 0
      %438 = vmatpush1.bf16.msra.mxu0 0
      %439 = vmatprep.subr.bf16.mxu0 0
      %440 = vmatpush1.bf16.msra.mxu0 0
      %441 = vmatprep.subr.bf16.mxu0 0
      %442 = vmatpush1.bf16.msra.mxu0 0
      %443 = vmatprep.subr.bf16.mxu0 0
      %444 = vmatpush1.bf16.msra.mxu0 0
      %445 = vmatprep.subr.bf16.mxu0 0
      %446 = vmatpush1.bf16.msra.mxu0 0
      %447 = vmatprep.subr.bf16.mxu0 0
      %448 = vmatpush1.bf16.msra.mxu0 0
      %449 = vmatprep.mubr.bf16.mxu0 0
      %450 = vmatmul.mubr.bf16.gmra.mrb[0].mxu0 %v412
      %v451 = vpop.f32.mrb[0].mxu0
      %v452 = vadd.f32 0.0, %v451
      %v453 = vpop.f32.mrb[0].mxu0
      %v454 = vpop.f32.mrb[0].mxu0
      %v455 = vpop.f32.mrb[0].mxu0
      %456 = vdwg.mxu0
      %v457 = vadd.f32 %v403, %v452
      %vm458 = vcmask 261120
      %459 = vst.msk [vmem:[%s259] sm:$0xff] %vm458, %v457
      %v460 = vsel %vm458, %v457, 0.0
      %461 = vadd.xlane.f32.xlu0 %v460
      %v462 = vpop.xlane.xlu0 %461
      %vm463 = vcmask 7168
      %464 = vst.msk [vmem:[%s263] sm:$0xff] %vm463, %v462
      %v465 = vmul.f32 %v457, %v457
      %v466 = vsel %vm458, %v465, 0.0
      %467 = vadd.xlane.f32.xlu0 %v466
      %v468 = vpop.xlane.xlu0 %467
      %469 = vst.msk [vmem:[%s267] sm:$0xff] %vm463, %v468
      %p470 = scmp.lt.s32.totalorder %s18, 1
      %s471 = scalar_select %p470, %s18, 1
      %s472 = smul.addr %s471, 8
      %s473 = scalar_lea.vmem %s4, %s472
      %p474 = scmp.lt.s32.totalorder %s18, 1
      %s475 = scalar_select %p474, %s18, 1
      %s476 = smul.addr %s475, 8
      %s477 = scalar_lea.vmem %s5, %s476
      %p478 = scmp.lt.s32.totalorder %s18, 1
      %s479 = scalar_select %p478, %s18, 1
      %s480 = smul.addr %s479, 8
      %s481 = scalar_lea.vmem %s6, %s480
      // Predicated region
      $region37: #{basic_block3x3_ncl.4} parent=35 // pred_check
        %p482 = pneg %p125
      $region38: #{basic_block3x3_ncl.4} parent=35 // pred_check_branch
        %484 = sbr.rel (%p482) target = $region40
      $region39: #{basic_block3x3_ncl.4} parent=35 // pred_region
        _
      $region40: #{basic_block3x3_ncl.4} parent=35 // pred_fallthru
        _
      // Predicated region
      $region41: #{basic_block3x3_ncl.4} parent=35 // pred_check
        %p485 = pneg %p151
      $region42: #{basic_block3x3_ncl.4} parent=35 // pred_check_branch
        %487 = sbr.rel (%p485) target = $region44
      $region43: #{basic_block3x3_ncl.4} parent=35 // pred_region
        _
      $region44: #{basic_block3x3_ncl.4} parent=35 // pred_fallthru
        _
      // Predicated region
      $region45: #{basic_block3x3_ncl.4} parent=35 // pred_check
        %p488 = pneg %p177
      $region46: #{basic_block3x3_ncl.4} parent=35 // pred_check_branch
        %490 = sbr.rel (%p488) target = $region48
      $region47: #{basic_block3x3_ncl.4} parent=35 // pred_region
        _
      $region48: #{basic_block3x3_ncl.4} parent=35 // pred_fallthru
        _
    $region36: #{basic_block3x3_ncl.4} parent=5 // pred_fallthru
      _
    %p491 = scmp.le.s32.totalorder 2, %s13
    // Predicated region
    $region49: #{basic_block3x3_ncl.4} parent=5 // pred_check
      %p492 = pneg %p491
    $region50: #{basic_block3x3_ncl.4} parent=5 // pred_check_branch
      %494 = sbr.rel (%p492) target = $region52
    $region51: #{basic_block3x3_ncl.4} parent=5 // pred_region
      %s495 = ssub.s32 %s13, 2
      // Predicated region
      $region53: #{basic_block3x3_ncl.4} parent=51 // pred_check
        %p496 = pneg %p131
      $region54: #{basic_block3x3_ncl.4} parent=51 // pred_check_branch
        %498 = sbr.rel (%p496) target = $region56
      $region55: #{basic_block3x3_ncl.4} parent=51 // pred_region
        %p499 = scmp.lt.s32.totalorder %s19, 1
        %s500 = scalar_select %p499, %s19, 1
        %s501 = smul.addr %s500, 8
        %s502 = scalar_lea.vmem %s4, %s501
      $region56: #{basic_block3x3_ncl.4} parent=51 // pred_fallthru
        _
      // Predicated region
      $region57: #{basic_block3x3_ncl.4} parent=51 // pred_check
        %p503 = pneg %p157
      $region58: #{basic_block3x3_ncl.4} parent=51 // pred_check_branch
        %505 = sbr.rel (%p503) target = $region60
      $region59: #{basic_block3x3_ncl.4} parent=51 // pred_region
        %p506 = scmp.lt.s32.totalorder %s19, 1
        %s507 = scalar_select %p506, %s19, 1
        %s508 = smul.addr %s507, 8
        %s509 = scalar_lea.vmem %s5, %s508
      $region60: #{basic_block3x3_ncl.4} parent=51 // pred_fallthru
        _
      // Predicated region
      $region61: #{basic_block3x3_ncl.4} parent=51 // pred_check
        %p510 = pneg %p183
      $region62: #{basic_block3x3_ncl.4} parent=51 // pred_check_branch
        %512 = sbr.rel (%p510) target = $region64
      $region63: #{basic_block3x3_ncl.4} parent=51 // pred_region
        %p513 = scmp.lt.s32.totalorder %s19, 1
        %s514 = scalar_select %p513, %s19, 1
        %s515 = smul.addr %s514, 8
        %s516 = scalar_lea.vmem %s6, %s515
      $region64: #{basic_block3x3_ncl.4} parent=51 // pred_fallthru
        _
    $region52: #{basic_block3x3_ncl.4} parent=5 // pred_fallthru
      _
  $region6: #{basic_block3x3_ncl.4} parent=0 // loop_footer
    %s17 = sadd.s32 1, %s13
  $region7: #{basic_block3x3_ncl.4} parent=0 // loop_footer_branch
    %12 = sbr.rel target = $region3
  $region8: #{basic_block3x3_ncl.4} parent=0 // loop_exit
    _

</llo_original>
